<compile_context>
chip_gen: v7x
topology: tpu7x:2x2x1
jax: 0.10.0
libtpu: 0.0.40
codegen_flags: <defaults>
</compile_context>

<pallas_src>
import functools
import math

import jax
import jax.numpy as jnp
from jax.experimental import pallas as pl
from jax.experimental.pallas import tpu as pltpu


# ----------------------------------------------------------------------------
# Small helpers
# ----------------------------------------------------------------------------
def round_up(x, m):
  return (x + m - 1) // m * m


def _pad2(a, rows, cols):
  return jnp.pad(a, ((0, rows - a.shape[0]), (0, cols - a.shape[1])))


# ----------------------------------------------------------------------------
# Pallas kernels
# ----------------------------------------------------------------------------
def gine_layer_kernel(dst_ref, x_ref, xsrc_ref, eemb_ref, ope_ref,
                      w1_ref, b1_ref, w2_ref, b2_ref,
                      o_ref, acc_ref, *, apply_relu: bool):
  """One GINEConv layer + (folded) outer BatchNorm (+ optional ReLU).

  Grid = (node tiles [parallel], edge tiles [arbitrary / reduction]).
    dst_ref  : [1, Te]   int32 destination node id per edge (-1 = padding)
    x_ref    : [Tn, Dp]  node features of this node tile (f32)
    xsrc_ref : [Te, Dp]  gathered x[src] for this edge tile (f32)
    eemb_ref : [Te, Dp]  bond-encoder edge embeddings (f32)
    ope_ref  : [1, Dp]   (1 + eps) broadcast row (f32)
    w1/w2    : bf16 BN-folded MLP weights; b1/b2: f32 folded biases
    acc_ref  : [Tn, Dp]  f32 VMEM scratch accumulator for the scatter-add
  """
  j = pl.program_id(1)

  @pl.when(j == 0)
  def _():
    acc_ref[...] = jnp.zeros_like(acc_ref)

  # message: relu(x_j + edge_attr)   (elementwise in f32)
  msg = jnp.maximum(xsrc_ref[...] + eemb_ref[...], 0.0)               # [Te, Dp]

  # Build the 0/1 (dst -> node row) scatter block in-register; it never
  # touches HBM.  Padded edges carry dst = -1 and match no node row.
  n_tile = x_ref.shape[0]
  e_tile = dst_ref.shape[1]
  node_ids = (pl.program_id(0) * n_tile
              + jax.lax.broadcasted_iota(jnp.int32, (n_tile, e_tile), 0))
  onehot = (node_ids == dst_ref[...]).astype(jnp.bfloat16)            # [Tn, Te]

  # scatter-add on the MXU, f32 accumulation
  acc_ref[...] += jnp.dot(onehot, msg.astype(jnp.bfloat16),
                          preferred_element_type=jnp.float32)

  @pl.when(j == pl.num_programs(1) - 1)
  def _():
    # (1 + eps) * x + aggregated messages
    h = ope_ref[...] * x_ref[...] + acc_ref[...]                      # [Tn, Dp]
    # MLP (BatchNorms already folded into w1/b1 and w2/b2)
    h1 = jnp.dot(h.astype(jnp.bfloat16), w1_ref[...],
                 preferred_element_type=jnp.float32) + b1_ref[...]
    h1 = jnp.maximum(h1, 0.0)                                         # [Tn, Hp]
    out = jnp.dot(h1.astype(jnp.bfloat16), w2_ref[...],
                  preferred_element_type=jnp.float32) + b2_ref[...]   # [Tn, Dp]
    if apply_relu:
      out = jnp.maximum(out, 0.0)
    o_ref[...] = out.astype(o_ref.dtype)


def virtual_mlp_kernel(batch_ref, pc_ref, vn_ref,
                       w1_ref, b1_ref, w2_ref, b2_ref,
                       o_ref, acc_ref):
  """global_add_pool(post_conv) + vn -> Linear/ReLU -> Linear/ReLU (BN folded).

  Grid = (node tiles [arbitrary / reduction]).
    batch_ref : [1, Tn]  int32 graph id per node (-1 = padding)
    pc_ref    : [Tn, Dp] post_conv node features (f32)
    vn_ref    : [Gp, Dp] current virtual-node features (f32)
    acc_ref   : [Gp, Dp] f32 pooled-sum accumulator
  """
  i = pl.program_id(0)

  @pl.when(i == 0)
  def _():
    acc_ref[...] = jnp.zeros_like(acc_ref)

  g_pad = acc_ref.shape[0]
  n_tile = batch_ref.shape[1]
  graph_ids = jax.lax.broadcasted_iota(jnp.int32, (g_pad, n_tile), 0)
  onehot = (graph_ids == batch_ref[...]).astype(jnp.bfloat16)         # [Gp, Tn]
  acc_ref[...] += jnp.dot(onehot, pc_ref[...].astype(jnp.bfloat16),
                          preferred_element_type=jnp.float32)

  @pl.when(i == pl.num_programs(0) - 1)
  def _():
    h = acc_ref[...] + vn_ref[...]                                    # [Gp, Dp]
    h1 = jnp.maximum(
        jnp.dot(h.astype(jnp.bfloat16), w1_ref[...],
                preferred_element_type=jnp.float32) + b1_ref[...], 0.0)
    h2 = jnp.maximum(
        jnp.dot(h1.astype(jnp.bfloat16), w2_ref[...],
                preferred_element_type=jnp.float32) + b2_ref[...], 0.0)
    o_ref[...] = h2.astype(o_ref.dtype)


# ----------------------------------------------------------------------------
# pallas_call wrappers
# ----------------------------------------------------------------------------
def gine_layer(h_pad, xsrc_pad, eemb_pad, dst_row, p, apply_relu,
               *, n_tile, e_tile):
  Np, Dp = h_pad.shape
  Ep = eemb_pad.shape[0]
  kernel = functools.partial(gine_layer_kernel, apply_relu=apply_relu)
  return pl.pallas_call(
      kernel,
      out_shape=jax.ShapeDtypeStruct((Np, Dp), jnp.float32),
      grid=(Np // n_tile, Ep // e_tile),
      in_specs=[
          pl.BlockSpec((1, e_tile), lambda i, j: (0, j)),        # dst ids
          pl.BlockSpec((n_tile, Dp), lambda i, j: (i, 0)),       # x
          pl.BlockSpec((e_tile, Dp), lambda i, j: (j, 0)),       # x[src]
          pl.BlockSpec((e_tile, Dp), lambda i, j: (j, 0)),       # edge emb
          pl.BlockSpec((1, Dp), lambda i, j: (0, 0)),            # (1 + eps)
          pl.BlockSpec(p["w1"].shape, lambda i, j: (0, 0)),
          pl.BlockSpec(p["b1"].shape, lambda i, j: (0, 0)),
          pl.BlockSpec(p["w2"].shape, lambda i, j: (0, 0)),
          pl.BlockSpec(p["b2"].shape, lambda i, j: (0, 0)),
      ],
      out_specs=pl.BlockSpec((n_tile, Dp), lambda i, j: (i, 0)),
      scratch_shapes=[pltpu.VMEM((n_tile, Dp), jnp.float32)],
      compiler_params=pltpu.CompilerParams(
          dimension_semantics=("parallel", "arbitrary")),
  )(dst_row, h_pad, xsrc_pad, eemb_pad, p["one_plus_eps"],
    p["w1"], p["b1"], p["w2"], p["b2"])


def virtual_mlp(post_conv_pad, batch_row, vn_pad, p, *, n_tile):
  Np, Dp = post_conv_pad.shape
  Gp = vn_pad.shape[0]
  return pl.pallas_call(
      virtual_mlp_kernel,
      out_shape=jax.ShapeDtypeStruct((Gp, Dp), jnp.float32),
      grid=(Np // n_tile,),
      in_specs=[
          pl.BlockSpec((1, n_tile), lambda i: (0, i)),           # batch ids
          pl.BlockSpec((n_tile, Dp), lambda i: (i, 0)),          # post_conv
          pl.BlockSpec((Gp, Dp), lambda i: (0, 0)),              # vn
          pl.BlockSpec(p["w1"].shape, lambda i: (0, 0)),
          pl.BlockSpec(p["b1"].shape, lambda i: (0, 0)),
          pl.BlockSpec(p["w2"].shape, lambda i: (0, 0)),
          pl.BlockSpec(p["b2"].shape, lambda i: (0, 0)),
      ],
      out_specs=pl.BlockSpec((Gp, Dp), lambda i: (0, 0)),
      scratch_shapes=[pltpu.VMEM((Gp, Dp), jnp.float32)],
      compiler_params=pltpu.CompilerParams(
          dimension_semantics=("arbitrary",)),
  )(batch_row, post_conv_pad, vn_pad, p["w1"], p["b1"], p["w2"], p["b2"])


# ----------------------------------------------------------------------------
# Parameter initialization (deterministic, synthetic; BN folded + 128-padded)
# ----------------------------------------------------------------------------
ATOM_FEATURE_DIMS = [8, 4, 4, 4, 4, 4, 4, 2, 2]   # 9 categorical atom features
BOND_FEATURE_DIMS = [4, 4, 2]                      # 3 categorical bond features


def init_linear(key, din, dout):
  k1, k2 = jax.random.split(key)
  bound = 1.0 / math.sqrt(din)
  w = jax.random.uniform(k1, (din, dout), jnp.float32, -bound, bound)
  b = jax.random.uniform(k2, (dout,), jnp.float32, -bound, bound)
  return w, b


def init_bn_affine(key, d):
  """BatchNorm1d (eval mode) as per-feature scale/shift."""
  k1, k2, k3, k4 = jax.random.split(key, 4)
  gamma = 1.0 + 0.1 * jax.random.normal(k1, (d,), jnp.float32)
  beta = 0.1 * jax.random.normal(k2, (d,), jnp.float32)
  run_mean = 0.1 * jax.random.normal(k3, (d,), jnp.float32)
  run_var = 1.0 + 0.1 * jax.random.uniform(k4, (d,), jnp.float32)
  scale = gamma / jnp.sqrt(run_var + 1e-5)
  shift = beta - run_mean * scale
  return scale, shift


def fold_linear_bn(w, b, scale, shift):
  """(x @ w + b) * scale + shift  ==  x @ (w*scale) + (b*scale + shift)."""
  return w * scale[None, :], b * scale + shift


def pack_mlp(w1, b1, w2, b2, d_in_pad, d_hid_pad, d_out_pad):
  """Zero-pad to 128-lane multiples; weights to bf16, biases stay f32."""
  return {
      "w1": _pad2(w1, d_in_pad, d_hid_pad).astype(jnp.bfloat16),
      "b1": _pad2(b1[None, :], 1, d_hid_pad),
      "w2": _pad2(w2, d_hid_pad, d_out_pad).astype(jnp.bfloat16),
      "b2": _pad2(b2[None, :], 1, d_out_pad),
  }


def init_embedding_tables(key, dims, emb_dim, emb_dim_pad):
  keys = jax.random.split(key, len(dims))
  return [_pad2(0.1 * jax.random.normal(k, (v, emb_dim), jnp.float32),
                v, emb_dim_pad) for k, v in zip(keys, dims)]


def init_gine_conv(key, emb_dim, emb_dim_pad, hid_dim_pad):
  D = emb_dim
  ks = jax.random.split(key, 5)
  w1, b1 = init_linear(ks[0], D, 2 * D)
  s1, t1 = init_bn_affine(ks[1], 2 * D)           # BN inside the MLP
  w2, b2 = init_linear(ks[2], 2 * D, D)
  bn_s, bn_t = init_bn_affine(ks[4], D)           # outer per-layer BN
  w1, b1 = fold_linear_bn(w1, b1, s1, t1)
  w2, b2 = fold_linear_bn(w2, b2, bn_s, bn_t)
  p = pack_mlp(w1, b1, w2, b2, emb_dim_pad, hid_dim_pad, emb_dim_pad)
  p["bond_tables"] = init_embedding_tables(ks[3], BOND_FEATURE_DIMS,
                                           D, emb_dim_pad)
  eps = 0.0                                       # GINE eps parameter (init 0)
  p["one_plus_eps"] = jnp.full((1, emb_dim_pad), 1.0 + eps, jnp.float32)
  return p


def init_virtual_mlp(key, emb_dim, emb_dim_pad, hid_dim_pad):
  D = emb_dim
  ks = jax.random.split(key, 4)
  w1, b1 = init_linear(ks[0], D, 2 * D)
  s1, t1 = init_bn_affine(ks[1], 2 * D)
  w2, b2 = init_linear(ks[2], 2 * D, D)
  s2, t2 = init_bn_affine(ks[3], D)
  w1, b1 = fold_linear_bn(w1, b1, s1, t1)
  w2, b2 = fold_linear_bn(w2, b2, s2, t2)
  return pack_mlp(w1, b1, w2, b2, emb_dim_pad, hid_dim_pad, emb_dim_pad)


def init_params(key, num_layer, emb_dim):
  emb_dim_pad = round_up(emb_dim, 128)
  hid_dim_pad = round_up(2 * emb_dim, 128)
  ks = jax.random.split(key, 4 + num_layer)
  return {
      "atom_tables": init_embedding_tables(ks[0], ATOM_FEATURE_DIMS,
                                           emb_dim, emb_dim_pad),
      "vn_embedding": _pad2(jax.random.normal(ks[1], (1, emb_dim), jnp.float32),
                            1, emb_dim_pad),
      "virtual_mlp": init_virtual_mlp(ks[2], emb_dim, emb_dim_pad, hid_dim_pad),
      "conv1": init_gine_conv(ks[3], emb_dim, emb_dim_pad, hid_dim_pad),
      "convs": [init_gine_conv(ks[4 + i], emb_dim, emb_dim_pad, hid_dim_pad)
                for i in range(num_layer - 1)],
  }


# ----------------------------------------------------------------------------
# Forward pass (glue in plain JAX, hot path in Pallas kernels)
# ----------------------------------------------------------------------------
def multi_embedding_sum(tables, feat_ints):
  """Sum of per-feature embedding lookups (AtomEncoder / BondEncoder)."""
  out = tables[0][feat_ints[:, 0]]
  for f in range(1, len(tables)):
    out = out + tables[f][feat_ints[:, f]]
  return out


def vgin_mol_head_encoder_forward(params, x, edge_index, edge_attr, batch,
                                  *, num_layer, num_graphs, emb_dim):
  N = x.shape[0]
  E = edge_attr.shape[0]
  G = num_graphs                                  # static: no device->host sync
  Dp = params["atom_tables"][0].shape[1]
  src, dst = edge_index[0], edge_index[1]

  # ---- static tiling / padding -------------------------------------------
  # node tile: 256 (multiple of 8, shards across megacore cores) or single tile
  n_tile = 256 if N >= 256 else round_up(N, 8)
  Np = round_up(N, n_tile)
  # edge tile: multiple of 128 so the [1, Te] dst-index block is lane-aligned
  e_tile = 512 if E >= 512 else round_up(E, 128)
  Ep = round_up(E, e_tile)
  Gp = round_up(G, 8)

  dst_row = jnp.full((1, Ep), -1, jnp.int32).at[0, :E].set(dst.astype(jnp.int32))
  batch_row = jnp.full((1, Np), -1, jnp.int32).at[0, :N].set(
      batch.astype(jnp.int32))

  # ---- encoders / virtual node --------------------------------------------
  h = multi_embedding_sum(params["atom_tables"], x)               # [N, Dp]
  h = jnp.pad(h, ((0, Np - N), (0, 0)))
  vn = jnp.pad(jnp.tile(params["vn_embedding"][0:1], (G, 1)),
               ((0, Gp - G), (0, 0)))                             # [Gp, Dp]

  def edge_inputs(h_pad, p):
    xsrc = jnp.pad(h_pad[:N][src], ((0, Ep - E), (0, 0)))
    eemb = jnp.pad(multi_embedding_sum(p["bond_tables"], edge_attr),
                   ((0, Ep - E), (0, 0)))
    return xsrc, eemb

  # ---- layer 1: dropout1(relu1(batch_norm1(conv1(...)))) -------------------
  p = params["conv1"]
  xsrc, eemb = edge_inputs(h, p)
  post_conv = gine_layer(h, xsrc, eemb, dst_row, p, apply_relu=True,
                         n_tile=n_tile, e_tile=e_tile)

  # ---- remaining layers -----------------------------------------------------
  n_convs = num_layer - 1
  for i in range(n_convs):
    p = params["convs"][i]
    vn_nodes = jnp.pad(vn[batch], ((0, Np - N), (0, 0)))
    h_in = post_conv + vn_nodes
    xsrc, eemb = edge_inputs(h_in, p)
    apply_relu = i < n_convs - 1
    post_conv = gine_layer(h_in, xsrc, eemb, dst_row, p, apply_relu=apply_relu,
                           n_tile=n_tile, e_tile=e_tile)
    if i < n_convs - 1:
      vn = virtual_mlp(post_conv, batch_row, vn, params["virtual_mlp"],
                       n_tile=n_tile)

  return post_conv[:N, :emb_dim]


# ----------------------------------------------------------------------------
if __name__ == "__main__":
  key = jax.random.PRNGKey(0)
  num_layer = 3
  emb_dim = 32
  N, E, G = 32, 64, 2

  k_param, k_x, k_src, k_dst, k_ea = jax.random.split(key, 5)
  params = init_params(k_param, num_layer, emb_dim)

  # synthetic categorical node / edge features
  x_feats = jnp.stack(
      [jax.random.randint(jax.random.fold_in(k_x, f), (N,), 0, v)
       for f, v in enumerate(ATOM_FEATURE_DIMS)], axis=1).astype(jnp.int32)
  edge_attr = jnp.stack(
      [jax.random.randint(jax.random.fold_in(k_ea, f), (E,), 0, v)
       for f, v in enumerate(BOND_FEATURE_DIMS)], axis=1).astype(jnp.int32)

  # two graphs of 16 nodes each; edges stay within their graph
  batch = jnp.concatenate(
      [jnp.zeros((N // 2,), jnp.int32), jnp.ones((N // 2,), jnp.int32)])
  src_local = jax.random.randint(k_src, (E,), 0, N // 2)
  dst_local = jax.random.randint(k_dst, (E,), 0, N // 2)
  graph_of_edge = jnp.concatenate(
      [jnp.zeros((E // 2,), jnp.int32), jnp.ones((E // 2,), jnp.int32)])
  src = src_local + graph_of_edge * (N // 2)
  dst = dst_local + graph_of_edge * (N // 2)
  edge_index = jnp.stack([src, dst], axis=0).astype(jnp.int32)

  fwd = jax.jit(functools.partial(vgin_mol_head_encoder_forward,
                                  num_layer=num_layer, num_graphs=G,
                                  emb_dim=emb_dim))
  out = fwd(params, x_feats, edge_index, edge_attr, batch)
  jax.block_until_ready(out)
  assert out.shape == (N, emb_dim), out.shape
  print("KERNEL_OK")
</pallas_src>

<mosaic_0001>
module attributes {stable_mosaic.version = 11 : i64} {
  func.func @virtual_mlp_kernel(%arg0: i32, %arg1: memref<1x32xi32, #tpu.memory_space<vmem>>, %arg2: memref<32x128xf32, #tpu.memory_space<vmem>>, %arg3: memref<8x128xf32, #tpu.memory_space<vmem>>, %arg4: memref<128x128xbf16, #tpu.memory_space<vmem>>, %arg5: memref<1x128xf32, #tpu.memory_space<vmem>>, %arg6: memref<128x128xbf16, #tpu.memory_space<vmem>>, %arg7: memref<1x128xf32, #tpu.memory_space<vmem>>, %arg8: memref<8x128xf32, #tpu.memory_space<vmem>>, %arg9: memref<8x128xf32, #tpu.memory_space<vmem>>) attributes {dimension_semantics = [#tpu.dimension_semantics<arbitrary>], iteration_bounds = array<i64: 1>, scalar_prefetch = 0 : i64, scratch_operands = 1 : i64, tpu.core_type = #tpu.core_type<tc>, window_params = [{transform_indices = @transform_0, window_bounds = array<i64: 1, 32>}, {transform_indices = @transform_1, window_bounds = array<i64: 32, 128>}, {pipeline_mode = #tpu.pipeline_mode<synchronous>, transform_indices = @transform_2, window_bounds = array<i64: 8, 128>}, {pipeline_mode = #tpu.pipeline_mode<synchronous>, transform_indices = @transform_3, window_bounds = array<i64: 128, 128>}, {pipeline_mode = #tpu.pipeline_mode<synchronous>, transform_indices = @transform_4, window_bounds = array<i64: 1, 128>}, {pipeline_mode = #tpu.pipeline_mode<synchronous>, transform_indices = @transform_5, window_bounds = array<i64: 128, 128>}, {pipeline_mode = #tpu.pipeline_mode<synchronous>, transform_indices = @transform_6, window_bounds = array<i64: 1, 128>}, {pipeline_mode = #tpu.pipeline_mode<synchronous>, transform_indices = @transform_7, window_bounds = array<i64: 8, 128>}]} {
    %c0_i32 = arith.constant 0 : i32
    %0 = arith.cmpi eq, %arg0, %c0_i32 : i32
    %1 = arith.extui %0 : i1 to i32
    %c0_i32_0 = arith.constant 0 : i32
    %2 = arith.cmpi ne, %1, %c0_i32_0 : i32
    scf.if %2 {
      %cst_10 = arith.constant 0.000000e+00 : f32
      %19 = vector.broadcast %cst_10 : f32 to vector<8x128xf32>
      %c0_11 = arith.constant 0 : index
      %c0_12 = arith.constant 0 : index
      %20 = vector.load %arg9[%c0_11, %c0_12] : memref<8x128xf32, #tpu.memory_space<vmem>>, vector<8x128xf32>
      tpu.vector_store %arg9[%c0_11, %c0_12], %19 {strides = array<i32>} : memref<8x128xf32, #tpu.memory_space<vmem>>, vector<8x128xf32>,
    } else {
    }
    %3 = tpu.iota {dimensions = array<i32: 0>} : vector<8x32xi32>
    %c0 = arith.constant 0 : index
    %c0_1 = arith.constant 0 : index
    %4 = vector.load %arg1[%c0, %c0_1] : memref<1x32xi32, #tpu.memory_space<vmem>>, vector<1x32xi32>
    %5 = vector.broadcast %4 : vector<1x32xi32> to vector<8x32xi32>
    %6 = arith.cmpi eq, %3, %5 : vector<8x32xi32>
    %7 = arith.extui %6 : vector<8x32xi1> to vector<8x32xi32>
    %8 = arith.sitofp %7 : vector<8x32xi32> to vector<8x32xf32>
    %9 = arith.truncf %8 : vector<8x32xf32> to vector<8x32xbf16>
    %c0_2 = arith.constant 0 : index
    %c0_3 = arith.constant 0 : index
    %10 = vector.load %arg9[%c0_2, %c0_3] : memref<8x128xf32, #tpu.memory_space<vmem>>, vector<8x128xf32>
    %c0_4 = arith.constant 0 : index
    %c0_5 = arith.constant 0 : index
    %11 = vector.load %arg2[%c0_4, %c0_5] : memref<32x128xf32, #tpu.memory_space<vmem>>, vector<32x128xf32>
    %12 = arith.truncf %11 : vector<32x128xf32> to vector<32x128xbf16>
    %cst = arith.constant dense<0.000000e+00> : vector<8x128xf32>
    %13 = tpu.matmul %9, %12, %cst {dimension_numbers = #tpu.dot_dimension_numbers<[1], [0], [0], [1], [0, 0, 1, 1], [], []>} : vector<8x32xbf16>, vector<32x128xbf16>, vector<8x128xf32> -> vector<8x128xf32>
    %14 = arith.addf %10, %13 : vector<8x128xf32>
    %c0_6 = arith.constant 0 : index
    %c0_7 = arith.constant 0 : index
    %15 = vector.load %arg9[%c0_6, %c0_7] : memref<8x128xf32, #tpu.memory_space<vmem>>, vector<8x128xf32>
    tpu.vector_store %arg9[%c0_6, %c0_7], %14 {strides = array<i32>} : memref<8x128xf32, #tpu.memory_space<vmem>>, vector<8x128xf32>,
    %c0_i32_8 = arith.constant 0 : i32
    %16 = arith.cmpi eq, %arg0, %c0_i32_8 : i32
    %17 = arith.extui %16 : i1 to i32
    %c0_i32_9 = arith.constant 0 : i32
    %18 = arith.cmpi ne, %17, %c0_i32_9 : i32
    scf.if %18 {
      %c0_10 = arith.constant 0 : index
      %c0_11 = arith.constant 0 : index
      %19 = vector.load %arg9[%c0_10, %c0_11] : memref<8x128xf32, #tpu.memory_space<vmem>>, vector<8x128xf32>
      %c0_12 = arith.constant 0 : index
      %c0_13 = arith.constant 0 : index
      %20 = vector.load %arg3[%c0_12, %c0_13] : memref<8x128xf32, #tpu.memory_space<vmem>>, vector<8x128xf32>
      %21 = arith.addf %19, %20 : vector<8x128xf32>
      %22 = arith.truncf %21 : vector<8x128xf32> to vector<8x128xbf16>
      %c0_14 = arith.constant 0 : index
      %c0_15 = arith.constant 0 : index
      %23 = vector.load %arg4[%c0_14, %c0_15] : memref<128x128xbf16, #tpu.memory_space<vmem>>, vector<128x128xbf16>
      %cst_16 = arith.constant dense<0.000000e+00> : vector<8x128xf32>
      %24 = tpu.matmul %22, %23, %cst_16 {dimension_numbers = #tpu.dot_dimension_numbers<[1], [0], [0], [1], [0, 0, 1, 1], [], []>} : vector<8x128xbf16>, vector<128x128xbf16>, vector<8x128xf32> -> vector<8x128xf32>
      %c0_17 = arith.constant 0 : index
      %c0_18 = arith.constant 0 : index
      %25 = vector.load %arg5[%c0_17, %c0_18] : memref<1x128xf32, #tpu.memory_space<vmem>>, vector<1x128xf32>
      %26 = vector.broadcast %25 : vector<1x128xf32> to vector<8x128xf32>
      %27 = arith.addf %24, %26 : vector<8x128xf32>
      %cst_19 = arith.constant 0.000000e+00 : f32
      %28 = vector.broadcast %cst_19 : f32 to vector<8x128xf32>
      %29 = arith.maximumf %27, %28 : vector<8x128xf32>
      %30 = arith.truncf %29 : vector<8x128xf32> to vector<8x128xbf16>
      %c0_20 = arith.constant 0 : index
      %c0_21 = arith.constant 0 : index
      %31 = vector.load %arg6[%c0_20, %c0_21] : memref<128x128xbf16, #tpu.memory_space<vmem>>, vector<128x128xbf16>
      %cst_22 = arith.constant dense<0.000000e+00> : vector<8x128xf32>
      %32 = tpu.matmul %30, %31, %cst_22 {dimension_numbers = #tpu.dot_dimension_numbers<[1], [0], [0], [1], [0, 0, 1, 1], [], []>} : vector<8x128xbf16>, vector<128x128xbf16>, vector<8x128xf32> -> vector<8x128xf32>
      %c0_23 = arith.constant 0 : index
      %c0_24 = arith.constant 0 : index
      %33 = vector.load %arg7[%c0_23, %c0_24] : memref<1x128xf32, #tpu.memory_space<vmem>>, vector<1x128xf32>
      %34 = vector.broadcast %33 : vector<1x128xf32> to vector<8x128xf32>
      %35 = arith.addf %32, %34 : vector<8x128xf32>
      %cst_25 = arith.constant 0.000000e+00 : f32
      %36 = vector.broadcast %cst_25 : f32 to vector<8x128xf32>
      %37 = arith.maximumf %35, %36 : vector<8x128xf32>
      %c0_26 = arith.constant 0 : index
      %c0_27 = arith.constant 0 : index
      %38 = vector.load %arg8[%c0_26, %c0_27] : memref<8x128xf32, #tpu.memory_space<vmem>>, vector<8x128xf32>
      tpu.vector_store %arg8[%c0_26, %c0_27], %37 {strides = array<i32>} : memref<8x128xf32, #tpu.memory_space<vmem>>, vector<8x128xf32>,
    } else {
    }
    return
  }
  func.func @transform_0(%arg0: i32) -> (i32, i32) {
    %c0_i32 = arith.constant 0 : i32
    %c0_i32_0 = arith.constant 0 : i32
    return %c0_i32, %arg0 : i32, i32
  }
  func.func @transform_1(%arg0: i32) -> (i32, i32) {
    %c0_i32 = arith.constant 0 : i32
    %c0_i32_0 = arith.constant 0 : i32
    return %arg0, %c0_i32 : i32, i32
  }
  func.func @transform_2(%arg0: i32) -> (i32, i32) {
    %c0_i32 = arith.constant 0 : i32
    %c0_i32_0 = arith.constant 0 : i32
    %c0_i32_1 = arith.constant 0 : i32
    return %c0_i32, %c0_i32_0 : i32, i32
  }
  func.func @transform_3(%arg0: i32) -> (i32, i32) {
    %c0_i32 = arith.constant 0 : i32
    %c0_i32_0 = arith.constant 0 : i32
    %c0_i32_1 = arith.constant 0 : i32
    return %c0_i32, %c0_i32_0 : i32, i32
  }
  func.func @transform_4(%arg0: i32) -> (i32, i32) {
    %c0_i32 = arith.constant 0 : i32
    %c0_i32_0 = arith.constant 0 : i32
    %c0_i32_1 = arith.constant 0 : i32
    return %c0_i32, %c0_i32_0 : i32, i32
  }
  func.func @transform_5(%arg0: i32) -> (i32, i32) {
    %c0_i32 = arith.constant 0 : i32
    %c0_i32_0 = arith.constant 0 : i32
    %c0_i32_1 = arith.constant 0 : i32
    return %c0_i32, %c0_i32_0 : i32, i32
  }
  func.func @transform_6(%arg0: i32) -> (i32, i32) {
    %c0_i32 = arith.constant 0 : i32
    %c0_i32_0 = arith.constant 0 : i32
    %c0_i32_1 = arith.constant 0 : i32
    return %c0_i32, %c0_i32_0 : i32, i32
  }
  func.func @transform_7(%arg0: i32) -> (i32, i32) {
    %c0_i32 = arith.constant 0 : i32
    %c0_i32_0 = arith.constant 0 : i32
    %c0_i32_1 = arith.constant 0 : i32
    return %c0_i32, %c0_i32_0 : i32, i32
  }
}

module attributes {stable_mosaic.version = 11 : i64} {
  func.func @gine_layer_kernel(%arg0: i32, %arg1: i32, %arg2: memref<1x128xi32, #tpu.memory_space<vmem>>, %arg3: memref<32x128xf32, #tpu.memory_space<vmem>>, %arg4: memref<128x128xf32, #tpu.memory_space<vmem>>, %arg5: memref<128x128xf32, #tpu.memory_space<vmem>>, %arg6: memref<1x128xf32, #tpu.memory_space<vmem>>, %arg7: memref<128x128xbf16, #tpu.memory_space<vmem>>, %arg8: memref<1x128xf32, #tpu.memory_space<vmem>>, %arg9: memref<128x128xbf16, #tpu.memory_space<vmem>>, %arg10: memref<1x128xf32, #tpu.memory_space<vmem>>, %arg11: memref<32x128xf32, #tpu.memory_space<vmem>>, %arg12: memref<32x128xf32, #tpu.memory_space<vmem>>) attributes {dimension_semantics = [#tpu.dimension_semantics<parallel>, #tpu.dimension_semantics<arbitrary>], iteration_bounds = array<i64: 1, 1>, scalar_prefetch = 0 : i64, scratch_operands = 1 : i64, tpu.core_type = #tpu.core_type<tc>, window_params = [{transform_indices = @transform_0, window_bounds = array<i64: 1, 128>}, {transform_indices = @transform_1, window_bounds = array<i64: 32, 128>}, {transform_indices = @transform_2, window_bounds = array<i64: 128, 128>}, {transform_indices = @transform_3, window_bounds = array<i64: 128, 128>}, {pipeline_mode = #tpu.pipeline_mode<synchronous>, transform_indices = @transform_4, window_bounds = array<i64: 1, 128>}, {pipeline_mode = #tpu.pipeline_mode<synchronous>, transform_indices = @transform_5, window_bounds = array<i64: 128, 128>}, {pipeline_mode = #tpu.pipeline_mode<synchronous>, transform_indices = @transform_6, window_bounds = array<i64: 1, 128>}, {pipeline_mode = #tpu.pipeline_mode<synchronous>, transform_indices = @transform_7, window_bounds = array<i64: 128, 128>}, {pipeline_mode = #tpu.pipeline_mode<synchronous>, transform_indices = @transform_8, window_bounds = array<i64: 1, 128>}, {transform_indices = @transform_9, window_bounds = array<i64: 32, 128>}]} {
    %c0_i32 = arith.constant 0 : i32
    %0 = arith.cmpi eq, %arg1, %c0_i32 : i32
    %1 = arith.extui %0 : i1 to i32
    %c0_i32_0 = arith.constant 0 : i32
    %2 = arith.cmpi ne, %1, %c0_i32_0 : i32
    scf.if %2 {
      %cst_13 = arith.constant 0.000000e+00 : f32
      %26 = vector.broadcast %cst_13 : f32 to vector<32x128xf32>
      %c0_14 = arith.constant 0 : index
      %c0_15 = arith.constant 0 : index
      %27 = vector.load %arg12[%c0_14, %c0_15] : memref<32x128xf32, #tpu.memory_space<vmem>>, vector<32x128xf32>
      tpu.vector_store %arg12[%c0_14, %c0_15], %26 {strides = array<i32>} : memref<32x128xf32, #tpu.memory_space<vmem>>, vector<32x128xf32>,
    } else {
    }
    %c0 = arith.constant 0 : index
    %c0_1 = arith.constant 0 : index
    %3 = vector.load %arg4[%c0, %c0_1] : memref<128x128xf32, #tpu.memory_space<vmem>>, vector<128x128xf32>
    %c0_2 = arith.constant 0 : index
    %c0_3 = arith.constant 0 : index
    %4 = vector.load %arg5[%c0_2, %c0_3] : memref<128x128xf32, #tpu.memory_space<vmem>>, vector<128x128xf32>
    %5 = arith.addf %3, %4 : vector<128x128xf32>
    %cst = arith.constant 0.000000e+00 : f32
    %6 = vector.broadcast %cst : f32 to vector<128x128xf32>
    %7 = arith.maximumf %5, %6 : vector<128x128xf32>
    %c32_i32 = arith.constant 32 : i32
    %8 = arith.muli %arg0, %c32_i32 : i32
    %9 = tpu.iota {dimensions = array<i32: 0>} : vector<32x128xi32>
    %10 = vector.broadcast %8 : i32 to vector<32x128xi32>
    %11 = arith.addi %10, %9 : vector<32x128xi32>
    %c0_4 = arith.constant 0 : index
    %c0_5 = arith.constant 0 : index
    %12 = vector.load %arg2[%c0_4, %c0_5] : memref<1x128xi32, #tpu.memory_space<vmem>>, vector<1x128xi32>
    %13 = vector.broadcast %12 : vector<1x128xi32> to vector<32x128xi32>
    %14 = arith.cmpi eq, %11, %13 : vector<32x128xi32>
    %15 = arith.extui %14 : vector<32x128xi1> to vector<32x128xi32>
    %16 = arith.sitofp %15 : vector<32x128xi32> to vector<32x128xf32>
    %17 = arith.truncf %16 : vector<32x128xf32> to vector<32x128xbf16>
    %c0_6 = arith.constant 0 : index
    %c0_7 = arith.constant 0 : index
    %18 = vector.load %arg12[%c0_6, %c0_7] : memref<32x128xf32, #tpu.memory_space<vmem>>, vector<32x128xf32>
    %19 = arith.truncf %7 : vector<128x128xf32> to vector<128x128xbf16>
    %cst_8 = arith.constant dense<0.000000e+00> : vector<32x128xf32>
    %20 = tpu.matmul %17, %19, %cst_8 {dimension_numbers = #tpu.dot_dimension_numbers<[1], [0], [0], [1], [0, 0, 1, 1], [], []>} : vector<32x128xbf16>, vector<128x128xbf16>, vector<32x128xf32> -> vector<32x128xf32>
    %21 = arith.addf %18, %20 : vector<32x128xf32>
    %c0_9 = arith.constant 0 : index
    %c0_10 = arith.constant 0 : index
    %22 = vector.load %arg12[%c0_9, %c0_10] : memref<32x128xf32, #tpu.memory_space<vmem>>, vector<32x128xf32>
    tpu.vector_store %arg12[%c0_9, %c0_10], %21 {strides = array<i32>} : memref<32x128xf32, #tpu.memory_space<vmem>>, vector<32x128xf32>,
    %c0_i32_11 = arith.constant 0 : i32
    %23 = arith.cmpi eq, %arg1, %c0_i32_11 : i32
    %24 = arith.extui %23 : i1 to i32
    %c0_i32_12 = arith.constant 0 : i32
    %25 = arith.cmpi ne, %24, %c0_i32_12 : i32
    scf.if %25 {
      %c0_13 = arith.constant 0 : index
      %c0_14 = arith.constant 0 : index
      %26 = vector.load %arg6[%c0_13, %c0_14] : memref<1x128xf32, #tpu.memory_space<vmem>>, vector<1x128xf32>
      %c0_15 = arith.constant 0 : index
      %c0_16 = arith.constant 0 : index
      %27 = vector.load %arg3[%c0_15, %c0_16] : memref<32x128xf32, #tpu.memory_space<vmem>>, vector<32x128xf32>
      %28 = vector.broadcast %26 : vector<1x128xf32> to vector<32x128xf32>
      %29 = arith.mulf %28, %27 : vector<32x128xf32>
      %c0_17 = arith.constant 0 : index
      %c0_18 = arith.constant 0 : index
      %30 = vector.load %arg12[%c0_17, %c0_18] : memref<32x128xf32, #tpu.memory_space<vmem>>, vector<32x128xf32>
      %31 = arith.addf %29, %30 : vector<32x128xf32>
      %32 = arith.truncf %31 : vector<32x128xf32> to vector<32x128xbf16>
      %c0_19 = arith.constant 0 : index
      %c0_20 = arith.constant 0 : index
      %33 = vector.load %arg7[%c0_19, %c0_20] : memref<128x128xbf16, #tpu.memory_space<vmem>>, vector<128x128xbf16>
      %cst_21 = arith.constant dense<0.000000e+00> : vector<32x128xf32>
      %34 = tpu.matmul %32, %33, %cst_21 {dimension_numbers = #tpu.dot_dimension_numbers<[1], [0], [0], [1], [0, 0, 1, 1], [], []>} : vector<32x128xbf16>, vector<128x128xbf16>, vector<32x128xf32> -> vector<32x128xf32>
      %c0_22 = arith.constant 0 : index
      %c0_23 = arith.constant 0 : index
      %35 = vector.load %arg8[%c0_22, %c0_23] : memref<1x128xf32, #tpu.memory_space<vmem>>, vector<1x128xf32>
      %36 = vector.broadcast %35 : vector<1x128xf32> to vector<32x128xf32>
      %37 = arith.addf %34, %36 : vector<32x128xf32>
      %cst_24 = arith.constant 0.000000e+00 : f32
      %38 = vector.broadcast %cst_24 : f32 to vector<32x128xf32>
      %39 = arith.maximumf %37, %38 : vector<32x128xf32>
      %40 = arith.truncf %39 : vector<32x128xf32> to vector<32x128xbf16>
      %c0_25 = arith.constant 0 : index
      %c0_26 = arith.constant 0 : index
      %41 = vector.load %arg9[%c0_25, %c0_26] : memref<128x128xbf16, #tpu.memory_space<vmem>>, vector<128x128xbf16>
      %cst_27 = arith.constant dense<0.000000e+00> : vector<32x128xf32>
      %42 = tpu.matmul %40, %41, %cst_27 {dimension_numbers = #tpu.dot_dimension_numbers<[1], [0], [0], [1], [0, 0, 1, 1], [], []>} : vector<32x128xbf16>, vector<128x128xbf16>, vector<32x128xf32> -> vector<32x128xf32>
      %c0_28 = arith.constant 0 : index
      %c0_29 = arith.constant 0 : index
      %43 = vector.load %arg10[%c0_28, %c0_29] : memref<1x128xf32, #tpu.memory_space<vmem>>, vector<1x128xf32>
      %44 = vector.broadcast %43 : vector<1x128xf32> to vector<32x128xf32>
      %45 = arith.addf %42, %44 : vector<32x128xf32>
      %cst_30 = arith.constant 0.000000e+00 : f32
      %46 = vector.broadcast %cst_30 : f32 to vector<32x128xf32>
      %47 = arith.maximumf %45, %46 : vector<32x128xf32>
      %c0_31 = arith.constant 0 : index
      %c0_32 = arith.constant 0 : index
      %48 = vector.load %arg11[%c0_31, %c0_32] : memref<32x128xf32, #tpu.memory_space<vmem>>, vector<32x128xf32>
      tpu.vector_store %arg11[%c0_31, %c0_32], %47 {strides = array<i32>} : memref<32x128xf32, #tpu.memory_space<vmem>>, vector<32x128xf32>,
    } else {
    }
    return
  }
  func.func @transform_0(%arg0: i32, %arg1: i32) -> (i32, i32) {
    %c0_i32 = arith.constant 0 : i32
    %c0_i32_0 = arith.constant 0 : i32
    return %c0_i32, %arg1 : i32, i32
  }
  func.func @transform_1(%arg0: i32, %arg1: i32) -> (i32, i32) {
    %c0_i32 = arith.constant 0 : i32
    %c0_i32_0 = arith.constant 0 : i32
    return %arg0, %c0_i32 : i32, i32
  }
  func.func @transform_2(%arg0: i32, %arg1: i32) -> (i32, i32) {
    %c0_i32 = arith.constant 0 : i32
    %c0_i32_0 = arith.constant 0 : i32
    return %arg1, %c0_i32 : i32, i32
  }
  func.func @transform_3(%arg0: i32, %arg1: i32) -> (i32, i32) {
    %c0_i32 = arith.constant 0 : i32
    %c0_i32_0 = arith.constant 0 : i32
    return %arg1, %c0_i32 : i32, i32
  }
  func.func @transform_4(%arg0: i32, %arg1: i32) -> (i32, i32) {
    %c0_i32 = arith.constant 0 : i32
    %c0_i32_0 = arith.constant 0 : i32
    %c0_i32_1 = arith.constant 0 : i32
    return %c0_i32, %c0_i32_0 : i32, i32
  }
  func.func @transform_5(%arg0: i32, %arg1: i32) -> (i32, i32) {
    %c0_i32 = arith.constant 0 : i32
    %c0_i32_0 = arith.constant 0 : i32
    %c0_i32_1 = arith.constant 0 : i32
    return %c0_i32, %c0_i32_0 : i32, i32
  }
  func.func @transform_6(%arg0: i32, %arg1: i32) -> (i32, i32) {
    %c0_i32 = arith.constant 0 : i32
    %c0_i32_0 = arith.constant 0 : i32
    %c0_i32_1 = arith.constant 0 : i32
    return %c0_i32, %c0_i32_0 : i32, i32
  }
  func.func @transform_7(%arg0: i32, %arg1: i32) -> (i32, i32) {
    %c0_i32 = arith.constant 0 : i32
    %c0_i32_0 = arith.constant 0 : i32
    %c0_i32_1 = arith.constant 0 : i32
    return %c0_i32, %c0_i32_0 : i32, i32
  }
  func.func @transform_8(%arg0: i32, %arg1: i32) -> (i32, i32) {
    %c0_i32 = arith.constant 0 : i32
    %c0_i32_0 = arith.constant 0 : i32
    %c0_i32_1 = arith.constant 0 : i32
    return %c0_i32, %c0_i32_0 : i32, i32
  }
  func.func @transform_9(%arg0: i32, %arg1: i32) -> (i32, i32) {
    %c0_i32 = arith.constant 0 : i32
    %c0_i32_0 = arith.constant 0 : i32
    return %arg0, %c0_i32 : i32, i32
  }
}

module attributes {stable_mosaic.version = 11 : i64} {
  func.func @gine_layer_kernel(%arg0: i32, %arg1: i32, %arg2: memref<1x128xi32, #tpu.memory_space<vmem>>, %arg3: memref<32x128xf32, #tpu.memory_space<vmem>>, %arg4: memref<128x128xf32, #tpu.memory_space<vmem>>, %arg5: memref<128x128xf32, #tpu.memory_space<vmem>>, %arg6: memref<1x128xf32, #tpu.memory_space<vmem>>, %arg7: memref<128x128xbf16, #tpu.memory_space<vmem>>, %arg8: memref<1x128xf32, #tpu.memory_space<vmem>>, %arg9: memref<128x128xbf16, #tpu.memory_space<vmem>>, %arg10: memref<1x128xf32, #tpu.memory_space<vmem>>, %arg11: memref<32x128xf32, #tpu.memory_space<vmem>>, %arg12: memref<32x128xf32, #tpu.memory_space<vmem>>) attributes {dimension_semantics = [#tpu.dimension_semantics<parallel>, #tpu.dimension_semantics<arbitrary>], iteration_bounds = array<i64: 1, 1>, scalar_prefetch = 0 : i64, scratch_operands = 1 : i64, tpu.core_type = #tpu.core_type<tc>, window_params = [{transform_indices = @transform_0, window_bounds = array<i64: 1, 128>}, {transform_indices = @transform_1, window_bounds = array<i64: 32, 128>}, {transform_indices = @transform_2, window_bounds = array<i64: 128, 128>}, {transform_indices = @transform_3, window_bounds = array<i64: 128, 128>}, {pipeline_mode = #tpu.pipeline_mode<synchronous>, transform_indices = @transform_4, window_bounds = array<i64: 1, 128>}, {pipeline_mode = #tpu.pipeline_mode<synchronous>, transform_indices = @transform_5, window_bounds = array<i64: 128, 128>}, {pipeline_mode = #tpu.pipeline_mode<synchronous>, transform_indices = @transform_6, window_bounds = array<i64: 1, 128>}, {pipeline_mode = #tpu.pipeline_mode<synchronous>, transform_indices = @transform_7, window_bounds = array<i64: 128, 128>}, {pipeline_mode = #tpu.pipeline_mode<synchronous>, transform_indices = @transform_8, window_bounds = array<i64: 1, 128>}, {transform_indices = @transform_9, window_bounds = array<i64: 32, 128>}]} {
    %c0_i32 = arith.constant 0 : i32
    %0 = arith.cmpi eq, %arg1, %c0_i32 : i32
    %1 = arith.extui %0 : i1 to i32
    %c0_i32_0 = arith.constant 0 : i32
    %2 = arith.cmpi ne, %1, %c0_i32_0 : i32
    scf.if %2 {
      %cst_13 = arith.constant 0.000000e+00 : f32
      %26 = vector.broadcast %cst_13 : f32 to vector<32x128xf32>
      %c0_14 = arith.constant 0 : index
      %c0_15 = arith.constant 0 : index
      %27 = vector.load %arg12[%c0_14, %c0_15] : memref<32x128xf32, #tpu.memory_space<vmem>>, vector<32x128xf32>
      tpu.vector_store %arg12[%c0_14, %c0_15], %26 {strides = array<i32>} : memref<32x128xf32, #tpu.memory_space<vmem>>, vector<32x128xf32>,
    } else {
    }
    %c0 = arith.constant 0 : index
    %c0_1 = arith.constant 0 : index
    %3 = vector.load %arg4[%c0, %c0_1] : memref<128x128xf32, #tpu.memory_space<vmem>>, vector<128x128xf32>
    %c0_2 = arith.constant 0 : index
    %c0_3 = arith.constant 0 : index
    %4 = vector.load %arg5[%c0_2, %c0_3] : memref<128x128xf32, #tpu.memory_space<vmem>>, vector<128x128xf32>
    %5 = arith.addf %3, %4 : vector<128x128xf32>
    %cst = arith.constant 0.000000e+00 : f32
    %6 = vector.broadcast %cst : f32 to vector<128x128xf32>
    %7 = arith.maximumf %5, %6 : vector<128x128xf32>
    %c32_i32 = arith.constant 32 : i32
    %8 = arith.muli %arg0, %c32_i32 : i32
    %9 = tpu.iota {dimensions = array<i32: 0>} : vector<32x128xi32>
    %10 = vector.broadcast %8 : i32 to vector<32x128xi32>
    %11 = arith.addi %10, %9 : vector<32x128xi32>
    %c0_4 = arith.constant 0 : index
    %c0_5 = arith.constant 0 : index
    %12 = vector.load %arg2[%c0_4, %c0_5] : memref<1x128xi32, #tpu.memory_space<vmem>>, vector<1x128xi32>
    %13 = vector.broadcast %12 : vector<1x128xi32> to vector<32x128xi32>
    %14 = arith.cmpi eq, %11, %13 : vector<32x128xi32>
    %15 = arith.extui %14 : vector<32x128xi1> to vector<32x128xi32>
    %16 = arith.sitofp %15 : vector<32x128xi32> to vector<32x128xf32>
    %17 = arith.truncf %16 : vector<32x128xf32> to vector<32x128xbf16>
    %c0_6 = arith.constant 0 : index
    %c0_7 = arith.constant 0 : index
    %18 = vector.load %arg12[%c0_6, %c0_7] : memref<32x128xf32, #tpu.memory_space<vmem>>, vector<32x128xf32>
    %19 = arith.truncf %7 : vector<128x128xf32> to vector<128x128xbf16>
    %cst_8 = arith.constant dense<0.000000e+00> : vector<32x128xf32>
    %20 = tpu.matmul %17, %19, %cst_8 {dimension_numbers = #tpu.dot_dimension_numbers<[1], [0], [0], [1], [0, 0, 1, 1], [], []>} : vector<32x128xbf16>, vector<128x128xbf16>, vector<32x128xf32> -> vector<32x128xf32>
    %21 = arith.addf %18, %20 : vector<32x128xf32>
    %c0_9 = arith.constant 0 : index
    %c0_10 = arith.constant 0 : index
    %22 = vector.load %arg12[%c0_9, %c0_10] : memref<32x128xf32, #tpu.memory_space<vmem>>, vector<32x128xf32>
    tpu.vector_store %arg12[%c0_9, %c0_10], %21 {strides = array<i32>} : memref<32x128xf32, #tpu.memory_space<vmem>>, vector<32x128xf32>,
    %c0_i32_11 = arith.constant 0 : i32
    %23 = arith.cmpi eq, %arg1, %c0_i32_11 : i32
    %24 = arith.extui %23 : i1 to i32
    %c0_i32_12 = arith.constant 0 : i32
    %25 = arith.cmpi ne, %24, %c0_i32_12 : i32
    scf.if %25 {
      %c0_13 = arith.constant 0 : index
      %c0_14 = arith.constant 0 : index
      %26 = vector.load %arg6[%c0_13, %c0_14] : memref<1x128xf32, #tpu.memory_space<vmem>>, vector<1x128xf32>
      %c0_15 = arith.constant 0 : index
      %c0_16 = arith.constant 0 : index
      %27 = vector.load %arg3[%c0_15, %c0_16] : memref<32x128xf32, #tpu.memory_space<vmem>>, vector<32x128xf32>
      %28 = vector.broadcast %26 : vector<1x128xf32> to vector<32x128xf32>
      %29 = arith.mulf %28, %27 : vector<32x128xf32>
      %c0_17 = arith.constant 0 : index
      %c0_18 = arith.constant 0 : index
      %30 = vector.load %arg12[%c0_17, %c0_18] : memref<32x128xf32, #tpu.memory_space<vmem>>, vector<32x128xf32>
      %31 = arith.addf %29, %30 : vector<32x128xf32>
      %32 = arith.truncf %31 : vector<32x128xf32> to vector<32x128xbf16>
      %c0_19 = arith.constant 0 : index
      %c0_20 = arith.constant 0 : index
      %33 = vector.load %arg7[%c0_19, %c0_20] : memref<128x128xbf16, #tpu.memory_space<vmem>>, vector<128x128xbf16>
      %cst_21 = arith.constant dense<0.000000e+00> : vector<32x128xf32>
      %34 = tpu.matmul %32, %33, %cst_21 {dimension_numbers = #tpu.dot_dimension_numbers<[1], [0], [0], [1], [0, 0, 1, 1], [], []>} : vector<32x128xbf16>, vector<128x128xbf16>, vector<32x128xf32> -> vector<32x128xf32>
      %c0_22 = arith.constant 0 : index
      %c0_23 = arith.constant 0 : index
      %35 = vector.load %arg8[%c0_22, %c0_23] : memref<1x128xf32, #tpu.memory_space<vmem>>, vector<1x128xf32>
      %36 = vector.broadcast %35 : vector<1x128xf32> to vector<32x128xf32>
      %37 = arith.addf %34, %36 : vector<32x128xf32>
      %cst_24 = arith.constant 0.000000e+00 : f32
      %38 = vector.broadcast %cst_24 : f32 to vector<32x128xf32>
      %39 = arith.maximumf %37, %38 : vector<32x128xf32>
      %40 = arith.truncf %39 : vector<32x128xf32> to vector<32x128xbf16>
      %c0_25 = arith.constant 0 : index
      %c0_26 = arith.constant 0 : index
      %41 = vector.load %arg9[%c0_25, %c0_26] : memref<128x128xbf16, #tpu.memory_space<vmem>>, vector<128x128xbf16>
      %cst_27 = arith.constant dense<0.000000e+00> : vector<32x128xf32>
      %42 = tpu.matmul %40, %41, %cst_27 {dimension_numbers = #tpu.dot_dimension_numbers<[1], [0], [0], [1], [0, 0, 1, 1], [], []>} : vector<32x128xbf16>, vector<128x128xbf16>, vector<32x128xf32> -> vector<32x128xf32>
      %c0_28 = arith.constant 0 : index
      %c0_29 = arith.constant 0 : index
      %43 = vector.load %arg10[%c0_28, %c0_29] : memref<1x128xf32, #tpu.memory_space<vmem>>, vector<1x128xf32>
      %44 = vector.broadcast %43 : vector<1x128xf32> to vector<32x128xf32>
      %45 = arith.addf %42, %44 : vector<32x128xf32>
      %c0_30 = arith.constant 0 : index
      %c0_31 = arith.constant 0 : index
      %46 = vector.load %arg11[%c0_30, %c0_31] : memref<32x128xf32, #tpu.memory_space<vmem>>, vector<32x128xf32>
      tpu.vector_store %arg11[%c0_30, %c0_31], %45 {strides = array<i32>} : memref<32x128xf32, #tpu.memory_space<vmem>>, vector<32x128xf32>,
    } else {
    }
    return
  }
  func.func @transform_0(%arg0: i32, %arg1: i32) -> (i32, i32) {
    %c0_i32 = arith.constant 0 : i32
    %c0_i32_0 = arith.constant 0 : i32
    return %c0_i32, %arg1 : i32, i32
  }
  func.func @transform_1(%arg0: i32, %arg1: i32) -> (i32, i32) {
    %c0_i32 = arith.constant 0 : i32
    %c0_i32_0 = arith.constant 0 : i32
    return %arg0, %c0_i32 : i32, i32
  }
  func.func @transform_2(%arg0: i32, %arg1: i32) -> (i32, i32) {
    %c0_i32 = arith.constant 0 : i32
    %c0_i32_0 = arith.constant 0 : i32
    return %arg1, %c0_i32 : i32, i32
  }
  func.func @transform_3(%arg0: i32, %arg1: i32) -> (i32, i32) {
    %c0_i32 = arith.constant 0 : i32
    %c0_i32_0 = arith.constant 0 : i32
    return %arg1, %c0_i32 : i32, i32
  }
  func.func @transform_4(%arg0: i32, %arg1: i32) -> (i32, i32) {
    %c0_i32 = arith.constant 0 : i32
    %c0_i32_0 = arith.constant 0 : i32
    %c0_i32_1 = arith.constant 0 : i32
    return %c0_i32, %c0_i32_0 : i32, i32
  }
  func.func @transform_5(%arg0: i32, %arg1: i32) -> (i32, i32) {
    %c0_i32 = arith.constant 0 : i32
    %c0_i32_0 = arith.constant 0 : i32
    %c0_i32_1 = arith.constant 0 : i32
    return %c0_i32, %c0_i32_0 : i32, i32
  }
  func.func @transform_6(%arg0: i32, %arg1: i32) -> (i32, i32) {
    %c0_i32 = arith.constant 0 : i32
    %c0_i32_0 = arith.constant 0 : i32
    %c0_i32_1 = arith.constant 0 : i32
    return %c0_i32, %c0_i32_0 : i32, i32
  }
  func.func @transform_7(%arg0: i32, %arg1: i32) -> (i32, i32) {
    %c0_i32 = arith.constant 0 : i32
    %c0_i32_0 = arith.constant 0 : i32
    %c0_i32_1 = arith.constant 0 : i32
    return %c0_i32, %c0_i32_0 : i32, i32
  }
  func.func @transform_8(%arg0: i32, %arg1: i32) -> (i32, i32) {
    %c0_i32 = arith.constant 0 : i32
    %c0_i32_0 = arith.constant 0 : i32
    %c0_i32_1 = arith.constant 0 : i32
    return %c0_i32, %c0_i32_0 : i32, i32
  }
  func.func @transform_9(%arg0: i32, %arg1: i32) -> (i32, i32) {
    %c0_i32 = arith.constant 0 : i32
    %c0_i32_0 = arith.constant 0 : i32
    return %arg0, %c0_i32 : i32, i32
  }
}

</mosaic_0001>

<llo_original>
// kernel: vgin_mol_head_encoder_forward.4
$region0: #{vgin_mol_head_encoder_forward.4}
  #allocation0 [shape = 'u32[]', space=smem, size = 0x4, offset = 0x4, fixed_abs, tag = 'smem constant byte address 0x4 - core index']
  #allocation1 [shape = 'u32[144,128]{1,0:T(1,128)}', space=vmem, size = 0x12000, scoped, tag = 'internal scratch']
  #allocation2 [shape = 'f32[32,128]{1,0:T(8,128)}', space=vmem, size = 0x4000, scoped, tag = 'scratch operand']
  %s0 = inlined_call_operand.vmem [shape: s32[1,128], index: 0, kind: input, shape index: {}]
  %s1 = inlined_call_operand.vmem [shape: f32[32,128], index: 1, kind: input, shape index: {}]
  %s2 = inlined_call_operand.vmem [shape: f32[128,128], index: 2, kind: input, shape index: {}]
  %s3 = inlined_call_operand.vmem [shape: f32[128,128], index: 3, kind: input, shape index: {}]
  %s4 = inlined_call_operand.vmem [shape: f32[1,128], index: 4, kind: input, shape index: {}]
  %s5 = inlined_call_operand.vmem [shape: bf16[128,128], index: 5, kind: input, shape index: {}]
  %s6 = inlined_call_operand.vmem [shape: f32[1,128], index: 6, kind: input, shape index: {}]
  %s7 = inlined_call_operand.vmem [shape: bf16[128,128], index: 7, kind: input, shape index: {}]
  %s8 = inlined_call_operand.vmem [shape: f32[1,128], index: 8, kind: input, shape index: {}]
  %s9 = inlined_call_operand.vmem [shape: f32[32,128], index: 9, kind: output, shape index: {}]
  %s10 = sld [smem:[#allocation0]]
  $region54: #{vgin_mol_head_encoder_forward.4} parent=0
    _
  %s12 = ssub.s32 1, %s10
  %s13 = scalar_select 0, %s12, %s10
  // Predicated region
  $region2: #{vgin_mol_head_encoder_forward.4} parent=0 // pred_check
    _
  $region3: #{vgin_mol_head_encoder_forward.4} parent=0 // pred_check_branch
    %15 = sbr.rel (0) target = $region5
  $region4: #{vgin_mol_head_encoder_forward.4} parent=0 // pred_region
    _
  $region5: #{vgin_mol_head_encoder_forward.4} parent=0 // pred_fallthru
    _
  // Predicated region
  $region6: #{vgin_mol_head_encoder_forward.4} parent=0 // pred_check
    _
  $region7: #{vgin_mol_head_encoder_forward.4} parent=0 // pred_check_branch
    %17 = sbr.rel (0) target = $region9
  $region8: #{vgin_mol_head_encoder_forward.4} parent=0 // pred_region
    _
  $region9: #{vgin_mol_head_encoder_forward.4} parent=0 // pred_fallthru
    _
  // Predicated region
  $region10: #{vgin_mol_head_encoder_forward.4} parent=0 // pred_check
    _
  $region11: #{vgin_mol_head_encoder_forward.4} parent=0 // pred_check_branch
    %19 = sbr.rel (0) target = $region13
  $region12: #{vgin_mol_head_encoder_forward.4} parent=0 // pred_region
    _
  $region13: #{vgin_mol_head_encoder_forward.4} parent=0 // pred_fallthru
    _
  // Predicated region
  $region14: #{vgin_mol_head_encoder_forward.4} parent=0 // pred_check
    _
  $region15: #{vgin_mol_head_encoder_forward.4} parent=0 // pred_check_branch
    %21 = sbr.rel (0) target = $region17
  $region16: #{vgin_mol_head_encoder_forward.4} parent=0 // pred_region
    _
  $region17: #{vgin_mol_head_encoder_forward.4} parent=0 // pred_fallthru
    _
  // Predicated region
  $region18: #{vgin_mol_head_encoder_forward.4} parent=0 // pred_check
    _
  $region19: #{vgin_mol_head_encoder_forward.4} parent=0 // pred_check_branch
    %23 = sbr.rel (0) target = $region21
  $region20: #{vgin_mol_head_encoder_forward.4} parent=0 // pred_region
    _
  $region21: #{vgin_mol_head_encoder_forward.4} parent=0 // pred_fallthru
    _
  // Predicated region
  $region22: #{vgin_mol_head_encoder_forward.4} parent=0 // pred_check
    _
  $region23: #{vgin_mol_head_encoder_forward.4} parent=0 // pred_check_branch
    %25 = sbr.rel (0) target = $region25
  $region24: #{vgin_mol_head_encoder_forward.4} parent=0 // pred_region
    _
  $region25: #{vgin_mol_head_encoder_forward.4} parent=0 // pred_fallthru
    _
  // Predicated region
  $region26: #{vgin_mol_head_encoder_forward.4} parent=0 // pred_check
    _
  $region27: #{vgin_mol_head_encoder_forward.4} parent=0 // pred_check_branch
    %27 = sbr.rel (0) target = $region29
  $region28: #{vgin_mol_head_encoder_forward.4} parent=0 // pred_region
    _
  $region29: #{vgin_mol_head_encoder_forward.4} parent=0 // pred_fallthru
    _
  // Predicated region
  $region30: #{vgin_mol_head_encoder_forward.4} parent=0 // pred_check
    _
  $region31: #{vgin_mol_head_encoder_forward.4} parent=0 // pred_check_branch
    %29 = sbr.rel (0) target = $region33
  $region32: #{vgin_mol_head_encoder_forward.4} parent=0 // pred_region
    _
  $region33: #{vgin_mol_head_encoder_forward.4} parent=0 // pred_fallthru
    _
  // Predicated region
  $region34: #{vgin_mol_head_encoder_forward.4} parent=0 // pred_check
    _
  $region35: #{vgin_mol_head_encoder_forward.4} parent=0 // pred_check_branch
    %31 = sbr.rel (0) target = $region37
  $region36: #{vgin_mol_head_encoder_forward.4} parent=0 // pred_region
    _
  $region37: #{vgin_mol_head_encoder_forward.4} parent=0 // pred_fallthru
    _
  %p33 = scmp.eq.s32.totalorder 0, 0
  // Predicated region
  $region38: #{vgin_mol_head_encoder_forward.4} parent=0 // pred_check
    %p34 = pneg %p33
  $region39: #{vgin_mol_head_encoder_forward.4} parent=0 // pred_check_branch
    %36 = sbr.rel (%p34) target = $region41
  $region40: #{vgin_mol_head_encoder_forward.4} parent=0 // pred_region
    %37 = vst [vmem:[#allocation2] sm:$0xff] 0.0
    %38 = vst [vmem:[#allocation2 + $0x8] sm:$0xff] 0.0
    %39 = vst [vmem:[#allocation2 + $0x10] sm:$0xff] 0.0
    %40 = vst [vmem:[#allocation2 + $0x18] sm:$0xff] 0.0
  $region41: #{vgin_mol_head_encoder_forward.4} parent=0 // pred_fallthru
    _
  %v41 = vld [vmem:[%s2] sm:$0xff]
  %v42 = vld [vmem:[%s2 + $0x8] sm:$0xff]
  %v43 = vld [vmem:[%s2 + $0x10] sm:$0xff]
  %v44 = vld [vmem:[%s2 + $0x18] sm:$0xff]
  %v45 = vld [vmem:[%s2 + $0x20] sm:$0xff]
  %v46 = vld [vmem:[%s2 + $0x28] sm:$0xff]
  %v47 = vld [vmem:[%s2 + $0x30] sm:$0xff]
  %v48 = vld [vmem:[%s2 + $0x38] sm:$0xff]
  %v49 = vld [vmem:[%s2 + $0x40] sm:$0xff]
  %v50 = vld [vmem:[%s2 + $0x48] sm:$0xff]
  %v51 = vld [vmem:[%s2 + $0x50] sm:$0xff]
  %v52 = vld [vmem:[%s2 + $0x58] sm:$0xff]
  %v53 = vld [vmem:[%s2 + $0x60] sm:$0xff]
  %v54 = vld [vmem:[%s2 + $0x68] sm:$0xff]
  %v55 = vld [vmem:[%s2 + $0x70] sm:$0xff]
  %v56 = vld [vmem:[%s2 + $0x78] sm:$0xff]
  %v57 = vld [vmem:[%s3] sm:$0xff]
  %v58 = vld [vmem:[%s3 + $0x8] sm:$0xff]
  %v59 = vld [vmem:[%s3 + $0x10] sm:$0xff]
  %v60 = vld [vmem:[%s3 + $0x18] sm:$0xff]
  %v61 = vld [vmem:[%s3 + $0x20] sm:$0xff]
  %v62 = vld [vmem:[%s3 + $0x28] sm:$0xff]
  %v63 = vld [vmem:[%s3 + $0x30] sm:$0xff]
  %v64 = vld [vmem:[%s3 + $0x38] sm:$0xff]
  %v65 = vld [vmem:[%s3 + $0x40] sm:$0xff]
  %v66 = vld [vmem:[%s3 + $0x48] sm:$0xff]
  %v67 = vld [vmem:[%s3 + $0x50] sm:$0xff]
  %v68 = vld [vmem:[%s3 + $0x58] sm:$0xff]
  %v69 = vld [vmem:[%s3 + $0x60] sm:$0xff]
  %v70 = vld [vmem:[%s3 + $0x68] sm:$0xff]
  %v71 = vld [vmem:[%s3 + $0x70] sm:$0xff]
  %v72 = vld [vmem:[%s3 + $0x78] sm:$0xff]
  %v73 = vadd.f32 %v41, %v57
  %v74 = vadd.f32 %v42, %v58
  %v75 = vadd.f32 %v43, %v59
  %v76 = vadd.f32 %v44, %v60
  %v77 = vadd.f32 %v45, %v61
  %v78 = vadd.f32 %v46, %v62
  %v79 = vadd.f32 %v47, %v63
  %v80 = vadd.f32 %v48, %v64
  %v81 = vadd.f32 %v49, %v65
  %v82 = vadd.f32 %v50, %v66
  %v83 = vadd.f32 %v51, %v67
  %v84 = vadd.f32 %v52, %v68
  %v85 = vadd.f32 %v53, %v69
  %v86 = vadd.f32 %v54, %v70
  %v87 = vadd.f32 %v55, %v71
  %v88 = vadd.f32 %v56, %v72
  %v89 = vmax.f32 %v73, 0.0
  %v90 = vmax.f32 %v74, 0.0
  %v91 = vmax.f32 %v75, 0.0
  %v92 = vmax.f32 %v76, 0.0
  %v93 = vmax.f32 %v77, 0.0
  %v94 = vmax.f32 %v78, 0.0
  %v95 = vmax.f32 %v79, 0.0
  %v96 = vmax.f32 %v80, 0.0
  %v97 = vmax.f32 %v81, 0.0
  %v98 = vmax.f32 %v82, 0.0
  %v99 = vmax.f32 %v83, 0.0
  %v100 = vmax.f32 %v84, 0.0
  %v101 = vmax.f32 %v85, 0.0
  %v102 = vmax.f32 %v86, 0.0
  %v103 = vmax.f32 %v87, 0.0
  %v104 = vmax.f32 %v88, 0.0
  %s105 = smul.u32 0, 32
  %v106 = vlaneseq
  %v107 = vshrl.u32 %v106, 7
  %v108 = vadd.s32 %v107, 8
  %v109 = vadd.s32 %v107, 16
  %v110 = vadd.s32 %v107, 24
  %v111 = vstv %s105
  %v112 = vadd.s32 %v111, %v107
  %v113 = vadd.s32 %v111, %v108
  %v114 = vadd.s32 %v111, %v109
  %v115 = vadd.s32 %v111, %v110
  %v116 = vld [vmem:[%s0] sm:$0x1]
  %v117 = vlaneseq
  %v118 = vshrl.u32 %v117, 7
  %v119 = vsub.s32 0, %v118
  %v120 = vrot.slane %v116, %v119
  %vm121 = vcmp.eq.s32.totalorder %v112, %v120
  %vm122 = vcmp.eq.s32.totalorder %v113, %v120
  %vm123 = vcmp.eq.s32.totalorder %v114, %v120
  %vm124 = vcmp.eq.s32.totalorder %v115, %v120
  %v125 = vsel %vm121, 1, 0
  %v126 = vsel %vm122, 1, 0
  %v127 = vsel %vm123, 1, 0
  %v128 = vsel %vm124, 1, 0
  %v129 = vcvt.s32.f32 %v125
  %v130 = vcvt.s32.f32 %v126
  %v131 = vcvt.s32.f32 %v127
  %v132 = vcvt.s32.f32 %v128
  %v133 = vpack.c.bf16 %v130, %v129
  %v134 = vpack.c.bf16 %v132, %v131
  %v135 = vld [vmem:[#allocation2] sm:$0xff]
  %v136 = vld [vmem:[#allocation2 + $0x8] sm:$0xff]
  %v137 = vld [vmem:[#allocation2 + $0x10] sm:$0xff]
  %v138 = vld [vmem:[#allocation2 + $0x18] sm:$0xff]
  %v139 = vpack.c.bf16 %v90, %v89
  %v140 = vpack.c.bf16 %v92, %v91
  %v141 = vpack.c.bf16 %v94, %v93
  %v142 = vpack.c.bf16 %v96, %v95
  %v143 = vpack.c.bf16 %v98, %v97
  %v144 = vpack.c.bf16 %v100, %v99
  %v145 = vpack.c.bf16 %v102, %v101
  %v146 = vpack.c.bf16 %v104, %v103
  %147 = vmatprep.subr.bf16.mxu0 0
  %148 = vmatpush1.bf16.msra.mxu0 %v139
  %149 = vmatprep.subr.bf16.mxu0 0
  %150 = vmatpush1.bf16.msra.mxu0 %v140
  %151 = vmatprep.subr.bf16.mxu0 0
  %152 = vmatpush1.bf16.msra.mxu0 %v141
  %153 = vmatprep.subr.bf16.mxu0 0
  %154 = vmatpush1.bf16.msra.mxu0 %v142
  %155 = vmatprep.subr.bf16.mxu0 0
  %156 = vmatpush1.bf16.msra.mxu0 %v143
  %157 = vmatprep.subr.bf16.mxu0 0
  %158 = vmatpush1.bf16.msra.mxu0 %v144
  %159 = vmatprep.subr.bf16.mxu0 0
  %160 = vmatpush1.bf16.msra.mxu0 %v145
  %161 = vmatprep.subr.bf16.mxu0 0
  %162 = vmatpush1.bf16.msra.mxu0 %v146
  %163 = vmatprep.subr.bf16.mxu0 0
  %164 = vmatpush1.bf16.msra.mxu0 0
  %165 = vmatprep.subr.bf16.mxu0 0
  %166 = vmatpush1.bf16.msra.mxu0 0
  %167 = vmatprep.subr.bf16.mxu0 0
  %168 = vmatpush1.bf16.msra.mxu0 0
  %169 = vmatprep.subr.bf16.mxu0 0
  %170 = vmatpush1.bf16.msra.mxu0 0
  %171 = vmatprep.subr.bf16.mxu0 0
  %172 = vmatpush1.bf16.msra.mxu0 0
  %173 = vmatprep.subr.bf16.mxu0 0
  %174 = vmatpush1.bf16.msra.mxu0 0
  %175 = vmatprep.subr.bf16.mxu0 0
  %176 = vmatpush1.bf16.msra.mxu0 0
  %177 = vmatprep.subr.bf16.mxu0 0
  %178 = vmatpush1.bf16.msra.mxu0 0
  %179 = vmatprep.mubr.bf16.mxu0 0
  %180 = vmatmul.mubr.bf16.gmra.mrb[0].mxu0 %v133
  %v181 = vpop.f32.mrb[0].mxu0
  %v182 = vadd.f32 0.0, %v181
  %v183 = vpop.f32.mrb[0].mxu0
  %v184 = vpop.f32.mrb[0].mxu0
  %v185 = vadd.f32 0.0, %v184
  %v186 = vpop.f32.mrb[0].mxu0
  %187 = vmatprep.mubr.bf16.mxu0 0
  %188 = vmatmul.mubr.bf16.gmra.mrb[0].mxu0 %v134
  %v189 = vpop.f32.mrb[0].mxu0
  %v190 = vadd.f32 0.0, %v189
  %v191 = vpop.f32.mrb[0].mxu0
  %v192 = vpop.f32.mrb[0].mxu0
  %v193 = vadd.f32 0.0, %v192
  %v194 = vpop.f32.mrb[0].mxu0
  %195 = vdwg.mxu0
  %v196 = vadd.f32 %v135, %v182
  %v197 = vadd.f32 %v136, %v185
  %v198 = vadd.f32 %v137, %v190
  %v199 = vadd.f32 %v138, %v193
  %200 = vst [vmem:[#allocation2] sm:$0xff] %v196
  %201 = vst [vmem:[#allocation2 + $0x8] sm:$0xff] %v197
  %202 = vst [vmem:[#allocation2 + $0x10] sm:$0xff] %v198
  %203 = vst [vmem:[#allocation2 + $0x18] sm:$0xff] %v199
  // Predicated region
  $region42: #{vgin_mol_head_encoder_forward.4} parent=0 // pred_check
    %p204 = pneg %p33
  $region43: #{vgin_mol_head_encoder_forward.4} parent=0 // pred_check_branch
    %206 = sbr.rel (%p204) target = $region45
  $region44: #{vgin_mol_head_encoder_forward.4} parent=0 // pred_region
    %v207 = vld [vmem:[%s4] sm:$0x1]
    %v208 = vld [vmem:[%s1] sm:$0xff]
    %v209 = vld [vmem:[%s1 + $0x8] sm:$0xff]
    %v210 = vld [vmem:[%s1 + $0x10] sm:$0xff]
    %v211 = vld [vmem:[%s1 + $0x18] sm:$0xff]
    %v213 = vlaneseq
    %v214 = vshrl.u32 %v213, 7
    %v215 = vsub.s32 0, %v214
    %v216 = vrot.slane %v207, %v215
    %v218 = vmul.f32 %v216, %v208
    %v219 = vmul.f32 %v216, %v209
    %v220 = vmul.f32 %v216, %v210
    %v221 = vmul.f32 %v216, %v211
    %v222 = vld [vmem:[#allocation2] sm:$0xff]
    %v223 = vld [vmem:[#allocation2 + $0x8] sm:$0xff]
    %v224 = vld [vmem:[#allocation2 + $0x10] sm:$0xff]
    %v225 = vld [vmem:[#allocation2 + $0x18] sm:$0xff]
    %v226 = vadd.f32 %v218, %v222
    %v227 = vadd.f32 %v219, %v223
    %v228 = vadd.f32 %v220, %v224
    %v229 = vadd.f32 %v221, %v225
    %v230 = vpack.c.bf16 %v227, %v226
    %v231 = vpack.c.bf16 %v229, %v228
    %v232 = vld [vmem:[%s5] sm:$0xf]
    %v233 = vld [vmem:[%s5 + $0x4] sm:$0xf]
    %v234 = vld [vmem:[%s5 + $0x8] sm:$0xf]
    %v235 = vld [vmem:[%s5 + $0xc] sm:$0xf]
    %v236 = vld [vmem:[%s5 + $0x10] sm:$0xf]
    %v237 = vld [vmem:[%s5 + $0x14] sm:$0xf]
    %v238 = vld [vmem:[%s5 + $0x18] sm:$0xf]
    %v239 = vld [vmem:[%s5 + $0x1c] sm:$0xf]
    %v240 = vld [vmem:[%s5 + $0x20] sm:$0xf]
    %v241 = vld [vmem:[%s5 + $0x24] sm:$0xf]
    %v242 = vld [vmem:[%s5 + $0x28] sm:$0xf]
    %v243 = vld [vmem:[%s5 + $0x2c] sm:$0xf]
    %v244 = vld [vmem:[%s5 + $0x30] sm:$0xf]
    %v245 = vld [vmem:[%s5 + $0x34] sm:$0xf]
    %v246 = vld [vmem:[%s5 + $0x38] sm:$0xf]
    %v247 = vld [vmem:[%s5 + $0x3c] sm:$0xf]
    %v248 = vld [vmem:[%s6] sm:$0x1]
    %v250 = vlaneseq
    %v251 = vshrl.u32 %v250, 7
    %v252 = vsub.s32 0, %v251
    %v253 = vrot.slane %v248, %v252
    %v271 = vunpack.c.l.b16 %v232
    %v272 = vunpack.c.l.b16 %v233
    %v273 = vunpack.c.l.b16 %v234
    %v274 = vunpack.c.l.b16 %v235
    %v275 = vunpack.c.l.b16 %v236
    %v276 = vunpack.c.l.b16 %v237
    %v277 = vunpack.c.l.b16 %v238
    %v278 = vunpack.c.l.b16 %v239
    %v279 = vunpack.c.l.b16 %v240
    %v280 = vunpack.c.l.b16 %v241
    %v281 = vunpack.c.l.b16 %v242
    %v282 = vunpack.c.l.b16 %v243
    %v283 = vunpack.c.l.b16 %v244
    %v284 = vunpack.c.l.b16 %v245
    %v285 = vunpack.c.l.b16 %v246
    %v286 = vunpack.c.l.b16 %v247
    %v287 = vpack.c.b16 %v272, %v271
    %v288 = vpack.c.b16 %v274, %v273
    %v289 = vpack.c.b16 %v276, %v275
    %v290 = vpack.c.b16 %v278, %v277
    %v291 = vpack.c.b16 %v280, %v279
    %v292 = vpack.c.b16 %v282, %v281
    %v293 = vpack.c.b16 %v284, %v283
    %v294 = vpack.c.b16 %v286, %v285
    %303 = vmatprep.subr.bf16.mxu0 0
    %304 = vmatpush1.bf16.msra.mxu0 %v287
    %305 = vmatprep.subr.bf16.mxu0 0
    %306 = vmatpush1.bf16.msra.mxu0 %v288
    %307 = vmatprep.subr.bf16.mxu0 0
    %308 = vmatpush1.bf16.msra.mxu0 %v289
    %309 = vmatprep.subr.bf16.mxu0 0
    %310 = vmatpush1.bf16.msra.mxu0 %v290
    %311 = vmatprep.subr.bf16.mxu0 0
    %312 = vmatpush1.bf16.msra.mxu0 %v291
    %313 = vmatprep.subr.bf16.mxu0 0
    %314 = vmatpush1.bf16.msra.mxu0 %v292
    %315 = vmatprep.subr.bf16.mxu0 0
    %316 = vmatpush1.bf16.msra.mxu0 %v293
    %317 = vmatprep.subr.bf16.mxu0 0
    %318 = vmatpush1.bf16.msra.mxu0 %v294
    %319 = vmatprep.subr.bf16.mxu0 0
    %320 = vmatpush1.bf16.msra.mxu0 0
    %321 = vmatprep.subr.bf16.mxu0 0
    %322 = vmatpush1.bf16.msra.mxu0 0
    %323 = vmatprep.subr.bf16.mxu0 0
    %324 = vmatpush1.bf16.msra.mxu0 0
    %325 = vmatprep.subr.bf16.mxu0 0
    %326 = vmatpush1.bf16.msra.mxu0 0
    %327 = vmatprep.subr.bf16.mxu0 0
    %328 = vmatpush1.bf16.msra.mxu0 0
    %329 = vmatprep.subr.bf16.mxu0 0
    %330 = vmatpush1.bf16.msra.mxu0 0
    %331 = vmatprep.subr.bf16.mxu0 0
    %332 = vmatpush1.bf16.msra.mxu0 0
    %333 = vmatprep.subr.bf16.mxu0 0
    %334 = vmatpush1.bf16.msra.mxu0 0
    %335 = vmatprep.mubr.bf16.mxu0 0
    %336 = vmatmul.mubr.bf16.gmra.mrb[0].mxu0 %v230
    %v337 = vpop.f32.mrb[0].mxu0
    %v338 = vadd.f32 %v253, %v337
    %v339 = vpop.f32.mrb[0].mxu0
    %v340 = vpop.f32.mrb[0].mxu0
    %v341 = vadd.f32 %v253, %v340
    %v342 = vpop.f32.mrb[0].mxu0
    %343 = vmatprep.mubr.bf16.mxu0 0
    %344 = vmatmul.mubr.bf16.gmra.mrb[0].mxu0 %v231
    %v345 = vpop.f32.mrb[0].mxu0
    %v346 = vadd.f32 %v253, %v345
    %v347 = vpop.f32.mrb[0].mxu0
    %v348 = vpop.f32.mrb[0].mxu0
    %v349 = vadd.f32 %v253, %v348
    %v350 = vpop.f32.mrb[0].mxu0
    %351 = vdwg.mxu0
    %v352 = vmax.f32 %v338, 0.0
    %v353 = vmax.f32 %v341, 0.0
    %v354 = vmax.f32 %v346, 0.0
    %v355 = vmax.f32 %v349, 0.0
    %v356 = vpack.c.bf16 %v353, %v352
    %v357 = vpack.c.bf16 %v355, %v354
    %v358 = vld [vmem:[%s7] sm:$0xf]
    %v359 = vld [vmem:[%s7 + $0x4] sm:$0xf]
    %v360 = vld [vmem:[%s7 + $0x8] sm:$0xf]
    %v361 = vld [vmem:[%s7 + $0xc] sm:$0xf]
    %v362 = vld [vmem:[%s7 + $0x10] sm:$0xf]
    %v363 = vld [vmem:[%s7 + $0x14] sm:$0xf]
    %v364 = vld [vmem:[%s7 + $0x18] sm:$0xf]
    %v365 = vld [vmem:[%s7 + $0x1c] sm:$0xf]
    %v366 = vld [vmem:[%s7 + $0x20] sm:$0xf]
    %v367 = vld [vmem:[%s7 + $0x24] sm:$0xf]
    %v368 = vld [vmem:[%s7 + $0x28] sm:$0xf]
    %v369 = vld [vmem:[%s7 + $0x2c] sm:$0xf]
    %v370 = vld [vmem:[%s7 + $0x30] sm:$0xf]
    %v371 = vld [vmem:[%s7 + $0x34] sm:$0xf]
    %v372 = vld [vmem:[%s7 + $0x38] sm:$0xf]
    %v373 = vld [vmem:[%s7 + $0x3c] sm:$0xf]
    %v374 = vld [vmem:[%s8] sm:$0x1]
    %v376 = vlaneseq
    %v377 = vshrl.u32 %v376, 7
    %v378 = vsub.s32 0, %v377
    %v379 = vrot.slane %v374, %v378
    %v397 = vunpack.c.l.b16 %v358
    %v398 = vunpack.c.l.b16 %v359
    %v399 = vunpack.c.l.b16 %v360
    %v400 = vunpack.c.l.b16 %v361
    %v401 = vunpack.c.l.b16 %v362
    %v402 = vunpack.c.l.b16 %v363
    %v403 = vunpack.c.l.b16 %v364
    %v404 = vunpack.c.l.b16 %v365
    %v405 = vunpack.c.l.b16 %v366
    %v406 = vunpack.c.l.b16 %v367
    %v407 = vunpack.c.l.b16 %v368
    %v408 = vunpack.c.l.b16 %v369
    %v409 = vunpack.c.l.b16 %v370
    %v410 = vunpack.c.l.b16 %v371
    %v411 = vunpack.c.l.b16 %v372
    %v412 = vunpack.c.l.b16 %v373
    %v413 = vpack.c.b16 %v398, %v397
    %v414 = vpack.c.b16 %v400, %v399
    %v415 = vpack.c.b16 %v402, %v401
    %v416 = vpack.c.b16 %v404, %v403
    %v417 = vpack.c.b16 %v406, %v405
    %v418 = vpack.c.b16 %v408, %v407
    %v419 = vpack.c.b16 %v410, %v409
    %v420 = vpack.c.b16 %v412, %v411
    %429 = vmatprep.subr.bf16.mxu0 0
    %430 = vmatpush1.bf16.msra.mxu0 %v413
    %431 = vmatprep.subr.bf16.mxu0 0
    %432 = vmatpush1.bf16.msra.mxu0 %v414
    %433 = vmatprep.subr.bf16.mxu0 0
    %434 = vmatpush1.bf16.msra.mxu0 %v415
    %435 = vmatprep.subr.bf16.mxu0 0
    %436 = vmatpush1.bf16.msra.mxu0 %v416
    %437 = vmatprep.subr.bf16.mxu0 0
    %438 = vmatpush1.bf16.msra.mxu0 %v417
    %439 = vmatprep.subr.bf16.mxu0 0
    %440 = vmatpush1.bf16.msra.mxu0 %v418
    %441 = vmatprep.subr.bf16.mxu0 0
    %442 = vmatpush1.bf16.msra.mxu0 %v419
    %443 = vmatprep.subr.bf16.mxu0 0
    %444 = vmatpush1.bf16.msra.mxu0 %v420
    %445 = vmatprep.subr.bf16.mxu0 0
    %446 = vmatpush1.bf16.msra.mxu0 0
    %447 = vmatprep.subr.bf16.mxu0 0
    %448 = vmatpush1.bf16.msra.mxu0 0
    %449 = vmatprep.subr.bf16.mxu0 0
    %450 = vmatpush1.bf16.msra.mxu0 0
    %451 = vmatprep.subr.bf16.mxu0 0
    %452 = vmatpush1.bf16.msra.mxu0 0
    %453 = vmatprep.subr.bf16.mxu0 0
    %454 = vmatpush1.bf16.msra.mxu0 0
    %455 = vmatprep.subr.bf16.mxu0 0
    %456 = vmatpush1.bf16.msra.mxu0 0
    %457 = vmatprep.subr.bf16.mxu0 0
    %458 = vmatpush1.bf16.msra.mxu0 0
    %459 = vmatprep.subr.bf16.mxu0 0
    %460 = vmatpush1.bf16.msra.mxu0 0
    %461 = vmatprep.mubr.bf16.mxu0 0
    %462 = vmatmul.mubr.bf16.gmra.mrb[0].mxu0 %v356
    %v463 = vpop.f32.mrb[0].mxu0
    %v464 = vadd.f32 %v379, %v463
    %v465 = vpop.f32.mrb[0].mxu0
    %v466 = vpop.f32.mrb[0].mxu0
    %v467 = vadd.f32 %v379, %v466
    %v468 = vpop.f32.mrb[0].mxu0
    %469 = vmatprep.mubr.bf16.mxu0 0
    %470 = vmatmul.mubr.bf16.gmra.mrb[0].mxu0 %v357
    %v471 = vpop.f32.mrb[0].mxu0
    %v472 = vadd.f32 %v379, %v471
    %v473 = vpop.f32.mrb[0].mxu0
    %v474 = vpop.f32.mrb[0].mxu0
    %v475 = vadd.f32 %v379, %v474
    %v476 = vpop.f32.mrb[0].mxu0
    %477 = vdwg.mxu0
    %v478 = vmax.f32 %v464, 0.0
    %v479 = vmax.f32 %v467, 0.0
    %v480 = vmax.f32 %v472, 0.0
    %v481 = vmax.f32 %v475, 0.0
    %482 = vst [vmem:[%s9] sm:$0xff] %v478
    %483 = vst [vmem:[%s9 + $0x8] sm:$0xff] %v479
    %484 = vst [vmem:[%s9 + $0x10] sm:$0xff] %v480
    %485 = vst [vmem:[%s9 + $0x18] sm:$0xff] %v481
  $region45: #{vgin_mol_head_encoder_forward.4} parent=0 // pred_fallthru
    _
  // Predicated region
  $region46: #{vgin_mol_head_encoder_forward.4} parent=0 // pred_check
    _
  $region47: #{vgin_mol_head_encoder_forward.4} parent=0 // pred_check_branch
    %487 = sbr.rel (0) target = $region49
  $region48: #{vgin_mol_head_encoder_forward.4} parent=0 // pred_region
    _
  $region49: #{vgin_mol_head_encoder_forward.4} parent=0 // pred_fallthru
    _
  // Predicated region
  $region50: #{vgin_mol_head_encoder_forward.4} parent=0 // pred_check
    _
  $region51: #{vgin_mol_head_encoder_forward.4} parent=0 // pred_check_branch
    %489 = sbr.rel (0) target = $region53
  $region52: #{vgin_mol_head_encoder_forward.4} parent=0 // pred_region
    _
  $region53: #{vgin_mol_head_encoder_forward.4} parent=0 // pred_fallthru
    _

// kernel: vgin_mol_head_encoder_forward.6
$region0: #{vgin_mol_head_encoder_forward.6}
  #allocation0 [shape = 'u32[]', space=smem, size = 0x4, offset = 0x4, fixed_abs, tag = 'smem constant byte address 0x4 - core index']
  #allocation1 [shape = 'u32[144,128]{1,0:T(1,128)}', space=vmem, size = 0x12000, scoped, tag = 'internal scratch']
  #allocation2 [shape = 'f32[8,128]{1,0:T(8,128)}', space=vmem, size = 0x1000, scoped, tag = 'scratch operand']
  %s0 = inlined_call_operand.vmem [shape: s32[1,32], index: 0, kind: input, shape index: {}]
  %s1 = inlined_call_operand.vmem [shape: f32[32,128], index: 1, kind: input, shape index: {}]
  %s2 = inlined_call_operand.vmem [shape: f32[8,128], index: 2, kind: input, shape index: {}]
  %s3 = inlined_call_operand.vmem [shape: bf16[128,128], index: 3, kind: input, shape index: {}]
  %s4 = inlined_call_operand.vmem [shape: f32[1,128], index: 4, kind: input, shape index: {}]
  %s5 = inlined_call_operand.vmem [shape: bf16[128,128], index: 5, kind: input, shape index: {}]
  %s6 = inlined_call_operand.vmem [shape: f32[1,128], index: 6, kind: input, shape index: {}]
  %s7 = inlined_call_operand.vmem [shape: f32[8,128], index: 7, kind: output, shape index: {}]
  %s8 = sld [smem:[#allocation0]]
  $region46: #{vgin_mol_head_encoder_forward.6} parent=0
    _
  %s10 = ssub.s32 1, %s8
  %s11 = scalar_select 0, %s10, %s8
  // Predicated region
  $region2: #{vgin_mol_head_encoder_forward.6} parent=0 // pred_check
    _
  $region3: #{vgin_mol_head_encoder_forward.6} parent=0 // pred_check_branch
    %13 = sbr.rel (0) target = $region5
  $region4: #{vgin_mol_head_encoder_forward.6} parent=0 // pred_region
    _
  $region5: #{vgin_mol_head_encoder_forward.6} parent=0 // pred_fallthru
    _
  // Predicated region
  $region6: #{vgin_mol_head_encoder_forward.6} parent=0 // pred_check
    _
  $region7: #{vgin_mol_head_encoder_forward.6} parent=0 // pred_check_branch
    %15 = sbr.rel (0) target = $region9
  $region8: #{vgin_mol_head_encoder_forward.6} parent=0 // pred_region
    _
  $region9: #{vgin_mol_head_encoder_forward.6} parent=0 // pred_fallthru
    _
  // Predicated region
  $region10: #{vgin_mol_head_encoder_forward.6} parent=0 // pred_check
    _
  $region11: #{vgin_mol_head_encoder_forward.6} parent=0 // pred_check_branch
    %17 = sbr.rel (0) target = $region13
  $region12: #{vgin_mol_head_encoder_forward.6} parent=0 // pred_region
    _
  $region13: #{vgin_mol_head_encoder_forward.6} parent=0 // pred_fallthru
    _
  // Predicated region
  $region14: #{vgin_mol_head_encoder_forward.6} parent=0 // pred_check
    _
  $region15: #{vgin_mol_head_encoder_forward.6} parent=0 // pred_check_branch
    %19 = sbr.rel (0) target = $region17
  $region16: #{vgin_mol_head_encoder_forward.6} parent=0 // pred_region
    _
  $region17: #{vgin_mol_head_encoder_forward.6} parent=0 // pred_fallthru
    _
  // Predicated region
  $region18: #{vgin_mol_head_encoder_forward.6} parent=0 // pred_check
    _
  $region19: #{vgin_mol_head_encoder_forward.6} parent=0 // pred_check_branch
    %21 = sbr.rel (0) target = $region21
  $region20: #{vgin_mol_head_encoder_forward.6} parent=0 // pred_region
    _
  $region21: #{vgin_mol_head_encoder_forward.6} parent=0 // pred_fallthru
    _
  // Predicated region
  $region22: #{vgin_mol_head_encoder_forward.6} parent=0 // pred_check
    _
  $region23: #{vgin_mol_head_encoder_forward.6} parent=0 // pred_check_branch
    %23 = sbr.rel (0) target = $region25
  $region24: #{vgin_mol_head_encoder_forward.6} parent=0 // pred_region
    _
  $region25: #{vgin_mol_head_encoder_forward.6} parent=0 // pred_fallthru
    _
  // Predicated region
  $region26: #{vgin_mol_head_encoder_forward.6} parent=0 // pred_check
    _
  $region27: #{vgin_mol_head_encoder_forward.6} parent=0 // pred_check_branch
    %25 = sbr.rel (0) target = $region29
  $region28: #{vgin_mol_head_encoder_forward.6} parent=0 // pred_region
    _
  $region29: #{vgin_mol_head_encoder_forward.6} parent=0 // pred_fallthru
    _
  %p27 = scmp.eq.s32.totalorder 0, 0
  // Predicated region
  $region30: #{vgin_mol_head_encoder_forward.6} parent=0 // pred_check
    %p28 = pneg %p27
  $region31: #{vgin_mol_head_encoder_forward.6} parent=0 // pred_check_branch
    %30 = sbr.rel (%p28) target = $region33
  $region32: #{vgin_mol_head_encoder_forward.6} parent=0 // pred_region
    %31 = vst [vmem:[#allocation2] sm:$0xff] 0.0
  $region33: #{vgin_mol_head_encoder_forward.6} parent=0 // pred_fallthru
    _
  %v32 = vlaneseq
  %v33 = vshrl.u32 %v32, 7
  %v34 = vld [vmem:[%s0] sm:$0x1]
  %v35 = vlaneseq
  %v36 = vshrl.u32 %v35, 7
  %v37 = vsub.s32 0, %v36
  %v38 = vrot.slane %v34, %v37
  %vm39 = vcmp.eq.s32.totalorder %v33, %v38
  %v40 = vsel %vm39, 1, 0
  %v41 = vcvt.s32.f32 %v40
  %v42 = vpack.c.bf16 %v41, %v41
  %v43 = vld [vmem:[#allocation2] sm:$0xff]
  %v44 = vld [vmem:[%s1] sm:$0xff]
  %v45 = vld [vmem:[%s1 + $0x8] sm:$0xff]
  %v46 = vld [vmem:[%s1 + $0x10] sm:$0xff]
  %v47 = vld [vmem:[%s1 + $0x18] sm:$0xff]
  %v48 = vpack.c.bf16 %v45, %v44
  %v49 = vpack.c.bf16 %v47, %v46
  %vm50 = vcmask 261120
  %v52 = vsel %vm50, %v42, 0
  %54 = vmatprep.subr.bf16.mxu0 0
  %55 = vmatpush1.bf16.msra.mxu0 %v48
  %56 = vmatprep.subr.bf16.mxu0 0
  %57 = vmatpush1.bf16.msra.mxu0 %v49
  %58 = vmatprep.subr.bf16.mxu0 0
  %59 = vmatpush1.bf16.msra.mxu0 0
  %60 = vmatprep.subr.bf16.mxu0 0
  %61 = vmatpush1.bf16.msra.mxu0 0
  %62 = vmatprep.subr.bf16.mxu0 0
  %63 = vmatpush1.bf16.msra.mxu0 0
  %64 = vmatprep.subr.bf16.mxu0 0
  %65 = vmatpush1.bf16.msra.mxu0 0
  %66 = vmatprep.subr.bf16.mxu0 0
  %67 = vmatpush1.bf16.msra.mxu0 0
  %68 = vmatprep.subr.bf16.mxu0 0
  %69 = vmatpush1.bf16.msra.mxu0 0
  %70 = vmatprep.subr.bf16.mxu0 0
  %71 = vmatpush1.bf16.msra.mxu0 0
  %72 = vmatprep.subr.bf16.mxu0 0
  %73 = vmatpush1.bf16.msra.mxu0 0
  %74 = vmatprep.subr.bf16.mxu0 0
  %75 = vmatpush1.bf16.msra.mxu0 0
  %76 = vmatprep.subr.bf16.mxu0 0
  %77 = vmatpush1.bf16.msra.mxu0 0
  %78 = vmatprep.subr.bf16.mxu0 0
  %79 = vmatpush1.bf16.msra.mxu0 0
  %80 = vmatprep.subr.bf16.mxu0 0
  %81 = vmatpush1.bf16.msra.mxu0 0
  %82 = vmatprep.subr.bf16.mxu0 0
  %83 = vmatpush1.bf16.msra.mxu0 0
  %84 = vmatprep.subr.bf16.mxu0 0
  %85 = vmatpush1.bf16.msra.mxu0 0
  %86 = vmatprep.mubr.bf16.mxu0 0
  %87 = vmatmul.mubr.bf16.gmra.mrb[0].mxu0 %v52
  %v88 = vpop.f32.mrb[0].mxu0
  %v89 = vadd.f32 0.0, %v88
  %v90 = vpop.f32.mrb[0].mxu0
  %v91 = vpop.f32.mrb[0].mxu0
  %v92 = vpop.f32.mrb[0].mxu0
  %93 = vdwg.mxu0
  %v94 = vadd.f32 %v43, %v89
  %95 = vst [vmem:[#allocation2] sm:$0xff] %v94
  // Predicated region
  $region34: #{vgin_mol_head_encoder_forward.6} parent=0 // pred_check
    %p96 = pneg %p27
  $region35: #{vgin_mol_head_encoder_forward.6} parent=0 // pred_check_branch
    %98 = sbr.rel (%p96) target = $region37
  $region36: #{vgin_mol_head_encoder_forward.6} parent=0 // pred_region
    %v99 = vld [vmem:[#allocation2] sm:$0xff]
    %v100 = vld [vmem:[%s2] sm:$0xff]
    %v101 = vadd.f32 %v99, %v100
    %v102 = vpack.c.bf16 %v101, %v101
    %v103 = vld [vmem:[%s3] sm:$0xf]
    %v104 = vld [vmem:[%s3 + $0x4] sm:$0xf]
    %v105 = vld [vmem:[%s3 + $0x8] sm:$0xf]
    %v106 = vld [vmem:[%s3 + $0xc] sm:$0xf]
    %v107 = vld [vmem:[%s3 + $0x10] sm:$0xf]
    %v108 = vld [vmem:[%s3 + $0x14] sm:$0xf]
    %v109 = vld [vmem:[%s3 + $0x18] sm:$0xf]
    %v110 = vld [vmem:[%s3 + $0x1c] sm:$0xf]
    %v111 = vld [vmem:[%s3 + $0x20] sm:$0xf]
    %v112 = vld [vmem:[%s3 + $0x24] sm:$0xf]
    %v113 = vld [vmem:[%s3 + $0x28] sm:$0xf]
    %v114 = vld [vmem:[%s3 + $0x2c] sm:$0xf]
    %v115 = vld [vmem:[%s3 + $0x30] sm:$0xf]
    %v116 = vld [vmem:[%s3 + $0x34] sm:$0xf]
    %v117 = vld [vmem:[%s3 + $0x38] sm:$0xf]
    %v118 = vld [vmem:[%s3 + $0x3c] sm:$0xf]
    %v119 = vld [vmem:[%s4] sm:$0x1]
    %v121 = vlaneseq
    %v122 = vshrl.u32 %v121, 7
    %v123 = vsub.s32 0, %v122
    %v124 = vrot.slane %v119, %v123
    %v142 = vunpack.c.l.b16 %v103
    %v143 = vunpack.c.l.b16 %v104
    %v144 = vunpack.c.l.b16 %v105
    %v145 = vunpack.c.l.b16 %v106
    %v146 = vunpack.c.l.b16 %v107
    %v147 = vunpack.c.l.b16 %v108
    %v148 = vunpack.c.l.b16 %v109
    %v149 = vunpack.c.l.b16 %v110
    %v150 = vunpack.c.l.b16 %v111
    %v151 = vunpack.c.l.b16 %v112
    %v152 = vunpack.c.l.b16 %v113
    %v153 = vunpack.c.l.b16 %v114
    %v154 = vunpack.c.l.b16 %v115
    %v155 = vunpack.c.l.b16 %v116
    %v156 = vunpack.c.l.b16 %v117
    %v157 = vunpack.c.l.b16 %v118
    %v158 = vpack.c.b16 %v143, %v142
    %v159 = vpack.c.b16 %v145, %v144
    %v160 = vpack.c.b16 %v147, %v146
    %v161 = vpack.c.b16 %v149, %v148
    %v162 = vpack.c.b16 %v151, %v150
    %v163 = vpack.c.b16 %v153, %v152
    %v164 = vpack.c.b16 %v155, %v154
    %v165 = vpack.c.b16 %v157, %v156
    %174 = vmatprep.subr.bf16.mxu0 0
    %175 = vmatpush1.bf16.msra.mxu0 %v158
    %176 = vmatprep.subr.bf16.mxu0 0
    %177 = vmatpush1.bf16.msra.mxu0 %v159
    %178 = vmatprep.subr.bf16.mxu0 0
    %179 = vmatpush1.bf16.msra.mxu0 %v160
    %180 = vmatprep.subr.bf16.mxu0 0
    %181 = vmatpush1.bf16.msra.mxu0 %v161
    %182 = vmatprep.subr.bf16.mxu0 0
    %183 = vmatpush1.bf16.msra.mxu0 %v162
    %184 = vmatprep.subr.bf16.mxu0 0
    %185 = vmatpush1.bf16.msra.mxu0 %v163
    %186 = vmatprep.subr.bf16.mxu0 0
    %187 = vmatpush1.bf16.msra.mxu0 %v164
    %188 = vmatprep.subr.bf16.mxu0 0
    %189 = vmatpush1.bf16.msra.mxu0 %v165
    %190 = vmatprep.subr.bf16.mxu0 0
    %191 = vmatpush1.bf16.msra.mxu0 0
    %192 = vmatprep.subr.bf16.mxu0 0
    %193 = vmatpush1.bf16.msra.mxu0 0
    %194 = vmatprep.subr.bf16.mxu0 0
    %195 = vmatpush1.bf16.msra.mxu0 0
    %196 = vmatprep.subr.bf16.mxu0 0
    %197 = vmatpush1.bf16.msra.mxu0 0
    %198 = vmatprep.subr.bf16.mxu0 0
    %199 = vmatpush1.bf16.msra.mxu0 0
    %200 = vmatprep.subr.bf16.mxu0 0
    %201 = vmatpush1.bf16.msra.mxu0 0
    %202 = vmatprep.subr.bf16.mxu0 0
    %203 = vmatpush1.bf16.msra.mxu0 0
    %204 = vmatprep.subr.bf16.mxu0 0
    %205 = vmatpush1.bf16.msra.mxu0 0
    %206 = vmatprep.mubr.bf16.mxu0 0
    %207 = vmatmul.mubr.bf16.gmra.mrb[0].mxu0 %v102
    %v208 = vpop.f32.mrb[0].mxu0
    %v209 = vadd.f32 %v124, %v208
    %v210 = vpop.f32.mrb[0].mxu0
    %v211 = vpop.f32.mrb[0].mxu0
    %v212 = vpop.f32.mrb[0].mxu0
    %213 = vdwg.mxu0
    %v214 = vmax.f32 %v209, 0.0
    %v215 = vpack.c.bf16 %v214, %v214
    %v216 = vld [vmem:[%s5] sm:$0xf]
    %v217 = vld [vmem:[%s5 + $0x4] sm:$0xf]
    %v218 = vld [vmem:[%s5 + $0x8] sm:$0xf]
    %v219 = vld [vmem:[%s5 + $0xc] sm:$0xf]
    %v220 = vld [vmem:[%s5 + $0x10] sm:$0xf]
    %v221 = vld [vmem:[%s5 + $0x14] sm:$0xf]
    %v222 = vld [vmem:[%s5 + $0x18] sm:$0xf]
    %v223 = vld [vmem:[%s5 + $0x1c] sm:$0xf]
    %v224 = vld [vmem:[%s5 + $0x20] sm:$0xf]
    %v225 = vld [vmem:[%s5 + $0x24] sm:$0xf]
    %v226 = vld [vmem:[%s5 + $0x28] sm:$0xf]
    %v227 = vld [vmem:[%s5 + $0x2c] sm:$0xf]
    %v228 = vld [vmem:[%s5 + $0x30] sm:$0xf]
    %v229 = vld [vmem:[%s5 + $0x34] sm:$0xf]
    %v230 = vld [vmem:[%s5 + $0x38] sm:$0xf]
    %v231 = vld [vmem:[%s5 + $0x3c] sm:$0xf]
    %v232 = vld [vmem:[%s6] sm:$0x1]
    %v234 = vlaneseq
    %v235 = vshrl.u32 %v234, 7
    %v236 = vsub.s32 0, %v235
    %v237 = vrot.slane %v232, %v236
    %v255 = vunpack.c.l.b16 %v216
    %v256 = vunpack.c.l.b16 %v217
    %v257 = vunpack.c.l.b16 %v218
    %v258 = vunpack.c.l.b16 %v219
    %v259 = vunpack.c.l.b16 %v220
    %v260 = vunpack.c.l.b16 %v221
    %v261 = vunpack.c.l.b16 %v222
    %v262 = vunpack.c.l.b16 %v223
    %v263 = vunpack.c.l.b16 %v224
    %v264 = vunpack.c.l.b16 %v225
    %v265 = vunpack.c.l.b16 %v226
    %v266 = vunpack.c.l.b16 %v227
    %v267 = vunpack.c.l.b16 %v228
    %v268 = vunpack.c.l.b16 %v229
    %v269 = vunpack.c.l.b16 %v230
    %v270 = vunpack.c.l.b16 %v231
    %v271 = vpack.c.b16 %v256, %v255
    %v272 = vpack.c.b16 %v258, %v257
    %v273 = vpack.c.b16 %v260, %v259
    %v274 = vpack.c.b16 %v262, %v261
    %v275 = vpack.c.b16 %v264, %v263
    %v276 = vpack.c.b16 %v266, %v265
    %v277 = vpack.c.b16 %v268, %v267
    %v278 = vpack.c.b16 %v270, %v269
    %287 = vmatprep.subr.bf16.mxu0 0
    %288 = vmatpush1.bf16.msra.mxu0 %v271
    %289 = vmatprep.subr.bf16.mxu0 0
    %290 = vmatpush1.bf16.msra.mxu0 %v272
    %291 = vmatprep.subr.bf16.mxu0 0
    %292 = vmatpush1.bf16.msra.mxu0 %v273
    %293 = vmatprep.subr.bf16.mxu0 0
    %294 = vmatpush1.bf16.msra.mxu0 %v274
    %295 = vmatprep.subr.bf16.mxu0 0
    %296 = vmatpush1.bf16.msra.mxu0 %v275
    %297 = vmatprep.subr.bf16.mxu0 0
    %298 = vmatpush1.bf16.msra.mxu0 %v276
    %299 = vmatprep.subr.bf16.mxu0 0
    %300 = vmatpush1.bf16.msra.mxu0 %v277
    %301 = vmatprep.subr.bf16.mxu0 0
    %302 = vmatpush1.bf16.msra.mxu0 %v278
    %303 = vmatprep.subr.bf16.mxu0 0
    %304 = vmatpush1.bf16.msra.mxu0 0
    %305 = vmatprep.subr.bf16.mxu0 0
    %306 = vmatpush1.bf16.msra.mxu0 0
    %307 = vmatprep.subr.bf16.mxu0 0
    %308 = vmatpush1.bf16.msra.mxu0 0
    %309 = vmatprep.subr.bf16.mxu0 0
    %310 = vmatpush1.bf16.msra.mxu0 0
    %311 = vmatprep.subr.bf16.mxu0 0
    %312 = vmatpush1.bf16.msra.mxu0 0
    %313 = vmatprep.subr.bf16.mxu0 0
    %314 = vmatpush1.bf16.msra.mxu0 0
    %315 = vmatprep.subr.bf16.mxu0 0
    %316 = vmatpush1.bf16.msra.mxu0 0
    %317 = vmatprep.subr.bf16.mxu0 0
    %318 = vmatpush1.bf16.msra.mxu0 0
    %319 = vmatprep.mubr.bf16.mxu0 0
    %320 = vmatmul.mubr.bf16.gmra.mrb[0].mxu0 %v215
    %v321 = vpop.f32.mrb[0].mxu0
    %v322 = vadd.f32 %v237, %v321
    %v323 = vpop.f32.mrb[0].mxu0
    %v324 = vpop.f32.mrb[0].mxu0
    %v325 = vpop.f32.mrb[0].mxu0
    %326 = vdwg.mxu0
    %v327 = vmax.f32 %v322, 0.0
    %328 = vst [vmem:[%s7] sm:$0xff] %v327
  $region37: #{vgin_mol_head_encoder_forward.6} parent=0 // pred_fallthru
    _
  // Predicated region
  $region38: #{vgin_mol_head_encoder_forward.6} parent=0 // pred_check
    _
  $region39: #{vgin_mol_head_encoder_forward.6} parent=0 // pred_check_branch
    %330 = sbr.rel (0) target = $region41
  $region40: #{vgin_mol_head_encoder_forward.6} parent=0 // pred_region
    _
  $region41: #{vgin_mol_head_encoder_forward.6} parent=0 // pred_fallthru
    _
  // Predicated region
  $region42: #{vgin_mol_head_encoder_forward.6} parent=0 // pred_check
    _
  $region43: #{vgin_mol_head_encoder_forward.6} parent=0 // pred_check_branch
    %332 = sbr.rel (0) target = $region45
  $region44: #{vgin_mol_head_encoder_forward.6} parent=0 // pred_region
    _
  $region45: #{vgin_mol_head_encoder_forward.6} parent=0 // pred_fallthru
    _

// kernel: vgin_mol_head_encoder_forward.7
$region0: #{vgin_mol_head_encoder_forward.7}
  #allocation0 [shape = 'u32[]', space=smem, size = 0x4, offset = 0x4, fixed_abs, tag = 'smem constant byte address 0x4 - core index']
  #allocation1 [shape = 'u32[144,128]{1,0:T(1,128)}', space=vmem, size = 0x12000, scoped, tag = 'internal scratch']
  #allocation2 [shape = 'f32[32,128]{1,0:T(8,128)}', space=vmem, size = 0x4000, scoped, tag = 'scratch operand']
  %s0 = inlined_call_operand.vmem [shape: s32[1,128], index: 0, kind: input, shape index: {}]
  %s1 = inlined_call_operand.vmem [shape: f32[32,128], index: 1, kind: input, shape index: {}]
  %s2 = inlined_call_operand.vmem [shape: f32[128,128], index: 2, kind: input, shape index: {}]
  %s3 = inlined_call_operand.vmem [shape: f32[128,128], index: 3, kind: input, shape index: {}]
  %s4 = inlined_call_operand.vmem [shape: f32[1,128], index: 4, kind: input, shape index: {}]
  %s5 = inlined_call_operand.vmem [shape: bf16[128,128], index: 5, kind: input, shape index: {}]
  %s6 = inlined_call_operand.vmem [shape: f32[1,128], index: 6, kind: input, shape index: {}]
  %s7 = inlined_call_operand.vmem [shape: bf16[128,128], index: 7, kind: input, shape index: {}]
  %s8 = inlined_call_operand.vmem [shape: f32[1,128], index: 8, kind: input, shape index: {}]
  %s9 = inlined_call_operand.hbm [shape: f32[32,128], index: 9, kind: output, shape index: {}]
  %s10 = sld [smem:[#allocation0]]
  $region54: #{vgin_mol_head_encoder_forward.7} parent=0
    _
  %s12 = ssub.s32 1, %s10
  %s13 = scalar_select 0, %s12, %s10
  $region1: #{vgin_mol_head_encoder_forward.7} parent=0
    #allocation3 [shape = 'u8[16384]{0}', space=vmem, size = 0x4000, scoped, tag = 'output window, operand 0, single buffered']
    #allocation4 [shape = 's32[1]{0}', space=sflag, size = 0x4, scoped, tag = 'scoped memory for vgin_mol_head_encoder_forward.7']
    %14 = vsyncpa [#allocation4], 0
    // Predicated region
    $region2: #{vgin_mol_head_encoder_forward.7} parent=1 // pred_check
      _
    $region3: #{vgin_mol_head_encoder_forward.7} parent=1 // pred_check_branch
      %16 = sbr.rel (0) target = $region5
    $region4: #{vgin_mol_head_encoder_forward.7} parent=1 // pred_region
      _
    $region5: #{vgin_mol_head_encoder_forward.7} parent=1 // pred_fallthru
      _
    // Predicated region
    $region6: #{vgin_mol_head_encoder_forward.7} parent=1 // pred_check
      _
    $region7: #{vgin_mol_head_encoder_forward.7} parent=1 // pred_check_branch
      %18 = sbr.rel (0) target = $region9
    $region8: #{vgin_mol_head_encoder_forward.7} parent=1 // pred_region
      _
    $region9: #{vgin_mol_head_encoder_forward.7} parent=1 // pred_fallthru
      _
    // Predicated region
    $region10: #{vgin_mol_head_encoder_forward.7} parent=1 // pred_check
      _
    $region11: #{vgin_mol_head_encoder_forward.7} parent=1 // pred_check_branch
      %20 = sbr.rel (0) target = $region13
    $region12: #{vgin_mol_head_encoder_forward.7} parent=1 // pred_region
      _
    $region13: #{vgin_mol_head_encoder_forward.7} parent=1 // pred_fallthru
      _
    // Predicated region
    $region14: #{vgin_mol_head_encoder_forward.7} parent=1 // pred_check
      _
    $region15: #{vgin_mol_head_encoder_forward.7} parent=1 // pred_check_branch
      %22 = sbr.rel (0) target = $region17
    $region16: #{vgin_mol_head_encoder_forward.7} parent=1 // pred_region
      _
    $region17: #{vgin_mol_head_encoder_forward.7} parent=1 // pred_fallthru
      _
    // Predicated region
    $region18: #{vgin_mol_head_encoder_forward.7} parent=1 // pred_check
      _
    $region19: #{vgin_mol_head_encoder_forward.7} parent=1 // pred_check_branch
      %24 = sbr.rel (0) target = $region21
    $region20: #{vgin_mol_head_encoder_forward.7} parent=1 // pred_region
      _
    $region21: #{vgin_mol_head_encoder_forward.7} parent=1 // pred_fallthru
      _
    // Predicated region
    $region22: #{vgin_mol_head_encoder_forward.7} parent=1 // pred_check
      _
    $region23: #{vgin_mol_head_encoder_forward.7} parent=1 // pred_check_branch
      %26 = sbr.rel (0) target = $region25
    $region24: #{vgin_mol_head_encoder_forward.7} parent=1 // pred_region
      _
    $region25: #{vgin_mol_head_encoder_forward.7} parent=1 // pred_fallthru
      _
    // Predicated region
    $region26: #{vgin_mol_head_encoder_forward.7} parent=1 // pred_check
      _
    $region27: #{vgin_mol_head_encoder_forward.7} parent=1 // pred_check_branch
      %28 = sbr.rel (0) target = $region29
    $region28: #{vgin_mol_head_encoder_forward.7} parent=1 // pred_region
      _
    $region29: #{vgin_mol_head_encoder_forward.7} parent=1 // pred_fallthru
      _
    // Predicated region
    $region30: #{vgin_mol_head_encoder_forward.7} parent=1 // pred_check
      _
    $region31: #{vgin_mol_head_encoder_forward.7} parent=1 // pred_check_branch
      %30 = sbr.rel (0) target = $region33
    $region32: #{vgin_mol_head_encoder_forward.7} parent=1 // pred_region
      _
    $region33: #{vgin_mol_head_encoder_forward.7} parent=1 // pred_fallthru
      _
    // Predicated region
    $region34: #{vgin_mol_head_encoder_forward.7} parent=1 // pred_check
      _
    $region35: #{vgin_mol_head_encoder_forward.7} parent=1 // pred_check_branch
      %32 = sbr.rel (0) target = $region37
    $region36: #{vgin_mol_head_encoder_forward.7} parent=1 // pred_region
      _
    $region37: #{vgin_mol_head_encoder_forward.7} parent=1 // pred_fallthru
      _
    %p34 = scmp.eq.s32.totalorder 0, 0
    // Predicated region
    $region38: #{vgin_mol_head_encoder_forward.7} parent=1 // pred_check
      %p35 = pneg %p34
    $region39: #{vgin_mol_head_encoder_forward.7} parent=1 // pred_check_branch
      %37 = sbr.rel (%p35) target = $region41
    $region40: #{vgin_mol_head_encoder_forward.7} parent=1 // pred_region
      %38 = vst [vmem:[#allocation2] sm:$0xff] 0.0
      %39 = vst [vmem:[#allocation2 + $0x8] sm:$0xff] 0.0
      %40 = vst [vmem:[#allocation2 + $0x10] sm:$0xff] 0.0
      %41 = vst [vmem:[#allocation2 + $0x18] sm:$0xff] 0.0
    $region41: #{vgin_mol_head_encoder_forward.7} parent=1 // pred_fallthru
      _
    %v42 = vld [vmem:[%s2] sm:$0xff]
    %v43 = vld [vmem:[%s2 + $0x8] sm:$0xff]
    %v44 = vld [vmem:[%s2 + $0x10] sm:$0xff]
    %v45 = vld [vmem:[%s2 + $0x18] sm:$0xff]
    %v46 = vld [vmem:[%s2 + $0x20] sm:$0xff]
    %v47 = vld [vmem:[%s2 + $0x28] sm:$0xff]
    %v48 = vld [vmem:[%s2 + $0x30] sm:$0xff]
    %v49 = vld [vmem:[%s2 + $0x38] sm:$0xff]
    %v50 = vld [vmem:[%s2 + $0x40] sm:$0xff]
    %v51 = vld [vmem:[%s2 + $0x48] sm:$0xff]
    %v52 = vld [vmem:[%s2 + $0x50] sm:$0xff]
    %v53 = vld [vmem:[%s2 + $0x58] sm:$0xff]
    %v54 = vld [vmem:[%s2 + $0x60] sm:$0xff]
    %v55 = vld [vmem:[%s2 + $0x68] sm:$0xff]
    %v56 = vld [vmem:[%s2 + $0x70] sm:$0xff]
    %v57 = vld [vmem:[%s2 + $0x78] sm:$0xff]
    %v58 = vld [vmem:[%s3] sm:$0xff]
    %v59 = vld [vmem:[%s3 + $0x8] sm:$0xff]
    %v60 = vld [vmem:[%s3 + $0x10] sm:$0xff]
    %v61 = vld [vmem:[%s3 + $0x18] sm:$0xff]
    %v62 = vld [vmem:[%s3 + $0x20] sm:$0xff]
    %v63 = vld [vmem:[%s3 + $0x28] sm:$0xff]
    %v64 = vld [vmem:[%s3 + $0x30] sm:$0xff]
    %v65 = vld [vmem:[%s3 + $0x38] sm:$0xff]
    %v66 = vld [vmem:[%s3 + $0x40] sm:$0xff]
    %v67 = vld [vmem:[%s3 + $0x48] sm:$0xff]
    %v68 = vld [vmem:[%s3 + $0x50] sm:$0xff]
    %v69 = vld [vmem:[%s3 + $0x58] sm:$0xff]
    %v70 = vld [vmem:[%s3 + $0x60] sm:$0xff]
    %v71 = vld [vmem:[%s3 + $0x68] sm:$0xff]
    %v72 = vld [vmem:[%s3 + $0x70] sm:$0xff]
    %v73 = vld [vmem:[%s3 + $0x78] sm:$0xff]
    %v74 = vadd.f32 %v42, %v58
    %v75 = vadd.f32 %v43, %v59
    %v76 = vadd.f32 %v44, %v60
    %v77 = vadd.f32 %v45, %v61
    %v78 = vadd.f32 %v46, %v62
    %v79 = vadd.f32 %v47, %v63
    %v80 = vadd.f32 %v48, %v64
    %v81 = vadd.f32 %v49, %v65
    %v82 = vadd.f32 %v50, %v66
    %v83 = vadd.f32 %v51, %v67
    %v84 = vadd.f32 %v52, %v68
    %v85 = vadd.f32 %v53, %v69
    %v86 = vadd.f32 %v54, %v70
    %v87 = vadd.f32 %v55, %v71
    %v88 = vadd.f32 %v56, %v72
    %v89 = vadd.f32 %v57, %v73
    %v90 = vmax.f32 %v74, 0.0
    %v91 = vmax.f32 %v75, 0.0
    %v92 = vmax.f32 %v76, 0.0
    %v93 = vmax.f32 %v77, 0.0
    %v94 = vmax.f32 %v78, 0.0
    %v95 = vmax.f32 %v79, 0.0
    %v96 = vmax.f32 %v80, 0.0
    %v97 = vmax.f32 %v81, 0.0
    %v98 = vmax.f32 %v82, 0.0
    %v99 = vmax.f32 %v83, 0.0
    %v100 = vmax.f32 %v84, 0.0
    %v101 = vmax.f32 %v85, 0.0
    %v102 = vmax.f32 %v86, 0.0
    %v103 = vmax.f32 %v87, 0.0
    %v104 = vmax.f32 %v88, 0.0
    %v105 = vmax.f32 %v89, 0.0
    %s106 = smul.u32 0, 32
    %v107 = vlaneseq
    %v108 = vshrl.u32 %v107, 7
    %v109 = vadd.s32 %v108, 8
    %v110 = vadd.s32 %v108, 16
    %v111 = vadd.s32 %v108, 24
    %v112 = vstv %s106
    %v113 = vadd.s32 %v112, %v108
    %v114 = vadd.s32 %v112, %v109
    %v115 = vadd.s32 %v112, %v110
    %v116 = vadd.s32 %v112, %v111
    %v117 = vld [vmem:[%s0] sm:$0x1]
    %v118 = vlaneseq
    %v119 = vshrl.u32 %v118, 7
    %v120 = vsub.s32 0, %v119
    %v121 = vrot.slane %v117, %v120
    %vm122 = vcmp.eq.s32.totalorder %v113, %v121
    %vm123 = vcmp.eq.s32.totalorder %v114, %v121
    %vm124 = vcmp.eq.s32.totalorder %v115, %v121
    %vm125 = vcmp.eq.s32.totalorder %v116, %v121
    %v126 = vsel %vm122, 1, 0
    %v127 = vsel %vm123, 1, 0
    %v128 = vsel %vm124, 1, 0
    %v129 = vsel %vm125, 1, 0
    %v130 = vcvt.s32.f32 %v126
    %v131 = vcvt.s32.f32 %v127
    %v132 = vcvt.s32.f32 %v128
    %v133 = vcvt.s32.f32 %v129
    %v134 = vpack.c.bf16 %v131, %v130
    %v135 = vpack.c.bf16 %v133, %v132
    %v136 = vld [vmem:[#allocation2] sm:$0xff]
    %v137 = vld [vmem:[#allocation2 + $0x8] sm:$0xff]
    %v138 = vld [vmem:[#allocation2 + $0x10] sm:$0xff]
    %v139 = vld [vmem:[#allocation2 + $0x18] sm:$0xff]
    %v140 = vpack.c.bf16 %v91, %v90
    %v141 = vpack.c.bf16 %v93, %v92
    %v142 = vpack.c.bf16 %v95, %v94
    %v143 = vpack.c.bf16 %v97, %v96
    %v144 = vpack.c.bf16 %v99, %v98
    %v145 = vpack.c.bf16 %v101, %v100
    %v146 = vpack.c.bf16 %v103, %v102
    %v147 = vpack.c.bf16 %v105, %v104
    %148 = vmatprep.subr.bf16.mxu0 0
    %149 = vmatpush1.bf16.msra.mxu0 %v140
    %150 = vmatprep.subr.bf16.mxu0 0
    %151 = vmatpush1.bf16.msra.mxu0 %v141
    %152 = vmatprep.subr.bf16.mxu0 0
    %153 = vmatpush1.bf16.msra.mxu0 %v142
    %154 = vmatprep.subr.bf16.mxu0 0
    %155 = vmatpush1.bf16.msra.mxu0 %v143
    %156 = vmatprep.subr.bf16.mxu0 0
    %157 = vmatpush1.bf16.msra.mxu0 %v144
    %158 = vmatprep.subr.bf16.mxu0 0
    %159 = vmatpush1.bf16.msra.mxu0 %v145
    %160 = vmatprep.subr.bf16.mxu0 0
    %161 = vmatpush1.bf16.msra.mxu0 %v146
    %162 = vmatprep.subr.bf16.mxu0 0
    %163 = vmatpush1.bf16.msra.mxu0 %v147
    %164 = vmatprep.subr.bf16.mxu0 0
    %165 = vmatpush1.bf16.msra.mxu0 0
    %166 = vmatprep.subr.bf16.mxu0 0
    %167 = vmatpush1.bf16.msra.mxu0 0
    %168 = vmatprep.subr.bf16.mxu0 0
    %169 = vmatpush1.bf16.msra.mxu0 0
    %170 = vmatprep.subr.bf16.mxu0 0
    %171 = vmatpush1.bf16.msra.mxu0 0
    %172 = vmatprep.subr.bf16.mxu0 0
    %173 = vmatpush1.bf16.msra.mxu0 0
    %174 = vmatprep.subr.bf16.mxu0 0
    %175 = vmatpush1.bf16.msra.mxu0 0
    %176 = vmatprep.subr.bf16.mxu0 0
    %177 = vmatpush1.bf16.msra.mxu0 0
    %178 = vmatprep.subr.bf16.mxu0 0
    %179 = vmatpush1.bf16.msra.mxu0 0
    %180 = vmatprep.mubr.bf16.mxu0 0
    %181 = vmatmul.mubr.bf16.gmra.mrb[0].mxu0 %v134
    %v182 = vpop.f32.mrb[0].mxu0
    %v183 = vadd.f32 0.0, %v182
    %v184 = vpop.f32.mrb[0].mxu0
    %v185 = vpop.f32.mrb[0].mxu0
    %v186 = vadd.f32 0.0, %v185
    %v187 = vpop.f32.mrb[0].mxu0
    %188 = vmatprep.mubr.bf16.mxu0 0
    %189 = vmatmul.mubr.bf16.gmra.mrb[0].mxu0 %v135
    %v190 = vpop.f32.mrb[0].mxu0
    %v191 = vadd.f32 0.0, %v190
    %v192 = vpop.f32.mrb[0].mxu0
    %v193 = vpop.f32.mrb[0].mxu0
    %v194 = vadd.f32 0.0, %v193
    %v195 = vpop.f32.mrb[0].mxu0
    %196 = vdwg.mxu0
    %v197 = vadd.f32 %v136, %v183
    %v198 = vadd.f32 %v137, %v186
    %v199 = vadd.f32 %v138, %v191
    %v200 = vadd.f32 %v139, %v194
    %201 = vst [vmem:[#allocation2] sm:$0xff] %v197
    %202 = vst [vmem:[#allocation2 + $0x8] sm:$0xff] %v198
    %203 = vst [vmem:[#allocation2 + $0x10] sm:$0xff] %v199
    %204 = vst [vmem:[#allocation2 + $0x18] sm:$0xff] %v200
    // Predicated region
    $region42: #{vgin_mol_head_encoder_forward.7} parent=1 // pred_check
      %p205 = pneg %p34
    $region43: #{vgin_mol_head_encoder_forward.7} parent=1 // pred_check_branch
      %207 = sbr.rel (%p205) target = $region45
    $region44: #{vgin_mol_head_encoder_forward.7} parent=1 // pred_region
      %v208 = vld [vmem:[%s4] sm:$0x1]
      %v209 = vld [vmem:[%s1] sm:$0xff]
      %v210 = vld [vmem:[%s1 + $0x8] sm:$0xff]
      %v211 = vld [vmem:[%s1 + $0x10] sm:$0xff]
      %v212 = vld [vmem:[%s1 + $0x18] sm:$0xff]
      %v214 = vlaneseq
      %v215 = vshrl.u32 %v214, 7
      %v216 = vsub.s32 0, %v215
      %v217 = vrot.slane %v208, %v216
      %v219 = vmul.f32 %v217, %v209
      %v220 = vmul.f32 %v217, %v210
      %v221 = vmul.f32 %v217, %v211
      %v222 = vmul.f32 %v217, %v212
      %v223 = vld [vmem:[#allocation2] sm:$0xff]
      %v224 = vld [vmem:[#allocation2 + $0x8] sm:$0xff]
      %v225 = vld [vmem:[#allocation2 + $0x10] sm:$0xff]
      %v226 = vld [vmem:[#allocation2 + $0x18] sm:$0xff]
      %v227 = vadd.f32 %v219, %v223
      %v228 = vadd.f32 %v220, %v224
      %v229 = vadd.f32 %v221, %v225
      %v230 = vadd.f32 %v222, %v226
      %v231 = vpack.c.bf16 %v228, %v227
      %v232 = vpack.c.bf16 %v230, %v229
      %v233 = vld [vmem:[%s5] sm:$0xf]
      %v234 = vld [vmem:[%s5 + $0x4] sm:$0xf]
      %v235 = vld [vmem:[%s5 + $0x8] sm:$0xf]
      %v236 = vld [vmem:[%s5 + $0xc] sm:$0xf]
      %v237 = vld [vmem:[%s5 + $0x10] sm:$0xf]
      %v238 = vld [vmem:[%s5 + $0x14] sm:$0xf]
      %v239 = vld [vmem:[%s5 + $0x18] sm:$0xf]
      %v240 = vld [vmem:[%s5 + $0x1c] sm:$0xf]
      %v241 = vld [vmem:[%s5 + $0x20] sm:$0xf]
      %v242 = vld [vmem:[%s5 + $0x24] sm:$0xf]
      %v243 = vld [vmem:[%s5 + $0x28] sm:$0xf]
      %v244 = vld [vmem:[%s5 + $0x2c] sm:$0xf]
      %v245 = vld [vmem:[%s5 + $0x30] sm:$0xf]
      %v246 = vld [vmem:[%s5 + $0x34] sm:$0xf]
      %v247 = vld [vmem:[%s5 + $0x38] sm:$0xf]
      %v248 = vld [vmem:[%s5 + $0x3c] sm:$0xf]
      %v249 = vld [vmem:[%s6] sm:$0x1]
      %v251 = vlaneseq
      %v252 = vshrl.u32 %v251, 7
      %v253 = vsub.s32 0, %v252
      %v254 = vrot.slane %v249, %v253
      %v272 = vunpack.c.l.b16 %v233
      %v273 = vunpack.c.l.b16 %v234
      %v274 = vunpack.c.l.b16 %v235
      %v275 = vunpack.c.l.b16 %v236
      %v276 = vunpack.c.l.b16 %v237
      %v277 = vunpack.c.l.b16 %v238
      %v278 = vunpack.c.l.b16 %v239
      %v279 = vunpack.c.l.b16 %v240
      %v280 = vunpack.c.l.b16 %v241
      %v281 = vunpack.c.l.b16 %v242
      %v282 = vunpack.c.l.b16 %v243
      %v283 = vunpack.c.l.b16 %v244
      %v284 = vunpack.c.l.b16 %v245
      %v285 = vunpack.c.l.b16 %v246
      %v286 = vunpack.c.l.b16 %v247
      %v287 = vunpack.c.l.b16 %v248
      %v288 = vpack.c.b16 %v273, %v272
      %v289 = vpack.c.b16 %v275, %v274
      %v290 = vpack.c.b16 %v277, %v276
      %v291 = vpack.c.b16 %v279, %v278
      %v292 = vpack.c.b16 %v281, %v280
      %v293 = vpack.c.b16 %v283, %v282
      %v294 = vpack.c.b16 %v285, %v284
      %v295 = vpack.c.b16 %v287, %v286
      %304 = vmatprep.subr.bf16.mxu0 0
      %305 = vmatpush1.bf16.msra.mxu0 %v288
      %306 = vmatprep.subr.bf16.mxu0 0
      %307 = vmatpush1.bf16.msra.mxu0 %v289
      %308 = vmatprep.subr.bf16.mxu0 0
      %309 = vmatpush1.bf16.msra.mxu0 %v290
      %310 = vmatprep.subr.bf16.mxu0 0
      %311 = vmatpush1.bf16.msra.mxu0 %v291
      %312 = vmatprep.subr.bf16.mxu0 0
      %313 = vmatpush1.bf16.msra.mxu0 %v292
      %314 = vmatprep.subr.bf16.mxu0 0
      %315 = vmatpush1.bf16.msra.mxu0 %v293
      %316 = vmatprep.subr.bf16.mxu0 0
      %317 = vmatpush1.bf16.msra.mxu0 %v294
      %318 = vmatprep.subr.bf16.mxu0 0
      %319 = vmatpush1.bf16.msra.mxu0 %v295
      %320 = vmatprep.subr.bf16.mxu0 0
      %321 = vmatpush1.bf16.msra.mxu0 0
      %322 = vmatprep.subr.bf16.mxu0 0
      %323 = vmatpush1.bf16.msra.mxu0 0
      %324 = vmatprep.subr.bf16.mxu0 0
      %325 = vmatpush1.bf16.msra.mxu0 0
      %326 = vmatprep.subr.bf16.mxu0 0
      %327 = vmatpush1.bf16.msra.mxu0 0
      %328 = vmatprep.subr.bf16.mxu0 0
      %329 = vmatpush1.bf16.msra.mxu0 0
      %330 = vmatprep.subr.bf16.mxu0 0
      %331 = vmatpush1.bf16.msra.mxu0 0
      %332 = vmatprep.subr.bf16.mxu0 0
      %333 = vmatpush1.bf16.msra.mxu0 0
      %334 = vmatprep.subr.bf16.mxu0 0
      %335 = vmatpush1.bf16.msra.mxu0 0
      %336 = vmatprep.mubr.bf16.mxu0 0
      %337 = vmatmul.mubr.bf16.gmra.mrb[0].mxu0 %v231
      %v338 = vpop.f32.mrb[0].mxu0
      %v339 = vadd.f32 %v254, %v338
      %v340 = vpop.f32.mrb[0].mxu0
      %v341 = vpop.f32.mrb[0].mxu0
      %v342 = vadd.f32 %v254, %v341
      %v343 = vpop.f32.mrb[0].mxu0
      %344 = vmatprep.mubr.bf16.mxu0 0
      %345 = vmatmul.mubr.bf16.gmra.mrb[0].mxu0 %v232
      %v346 = vpop.f32.mrb[0].mxu0
      %v347 = vadd.f32 %v254, %v346
      %v348 = vpop.f32.mrb[0].mxu0
      %v349 = vpop.f32.mrb[0].mxu0
      %v350 = vadd.f32 %v254, %v349
      %v351 = vpop.f32.mrb[0].mxu0
      %352 = vdwg.mxu0
      %v353 = vmax.f32 %v339, 0.0
      %v354 = vmax.f32 %v342, 0.0
      %v355 = vmax.f32 %v347, 0.0
      %v356 = vmax.f32 %v350, 0.0
      %v357 = vpack.c.bf16 %v354, %v353
      %v358 = vpack.c.bf16 %v356, %v355
      %v359 = vld [vmem:[%s7] sm:$0xf]
      %v360 = vld [vmem:[%s7 + $0x4] sm:$0xf]
      %v361 = vld [vmem:[%s7 + $0x8] sm:$0xf]
      %v362 = vld [vmem:[%s7 + $0xc] sm:$0xf]
      %v363 = vld [vmem:[%s7 + $0x10] sm:$0xf]
      %v364 = vld [vmem:[%s7 + $0x14] sm:$0xf]
      %v365 = vld [vmem:[%s7 + $0x18] sm:$0xf]
      %v366 = vld [vmem:[%s7 + $0x1c] sm:$0xf]
      %v367 = vld [vmem:[%s7 + $0x20] sm:$0xf]
      %v368 = vld [vmem:[%s7 + $0x24] sm:$0xf]
      %v369 = vld [vmem:[%s7 + $0x28] sm:$0xf]
      %v370 = vld [vmem:[%s7 + $0x2c] sm:$0xf]
      %v371 = vld [vmem:[%s7 + $0x30] sm:$0xf]
      %v372 = vld [vmem:[%s7 + $0x34] sm:$0xf]
      %v373 = vld [vmem:[%s7 + $0x38] sm:$0xf]
      %v374 = vld [vmem:[%s7 + $0x3c] sm:$0xf]
      %v375 = vld [vmem:[%s8] sm:$0x1]
      %v377 = vlaneseq
      %v378 = vshrl.u32 %v377, 7
      %v379 = vsub.s32 0, %v378
      %v380 = vrot.slane %v375, %v379
      %v398 = vunpack.c.l.b16 %v359
      %v399 = vunpack.c.l.b16 %v360
      %v400 = vunpack.c.l.b16 %v361
      %v401 = vunpack.c.l.b16 %v362
      %v402 = vunpack.c.l.b16 %v363
      %v403 = vunpack.c.l.b16 %v364
      %v404 = vunpack.c.l.b16 %v365
      %v405 = vunpack.c.l.b16 %v366
      %v406 = vunpack.c.l.b16 %v367
      %v407 = vunpack.c.l.b16 %v368
      %v408 = vunpack.c.l.b16 %v369
      %v409 = vunpack.c.l.b16 %v370
      %v410 = vunpack.c.l.b16 %v371
      %v411 = vunpack.c.l.b16 %v372
      %v412 = vunpack.c.l.b16 %v373
      %v413 = vunpack.c.l.b16 %v374
      %v414 = vpack.c.b16 %v399, %v398
      %v415 = vpack.c.b16 %v401, %v400
      %v416 = vpack.c.b16 %v403, %v402
      %v417 = vpack.c.b16 %v405, %v404
      %v418 = vpack.c.b16 %v407, %v406
      %v419 = vpack.c.b16 %v409, %v408
      %v420 = vpack.c.b16 %v411, %v410
      %v421 = vpack.c.b16 %v413, %v412
      %430 = vmatprep.subr.bf16.mxu0 0
      %431 = vmatpush1.bf16.msra.mxu0 %v414
      %432 = vmatprep.subr.bf16.mxu0 0
      %433 = vmatpush1.bf16.msra.mxu0 %v415
      %434 = vmatprep.subr.bf16.mxu0 0
      %435 = vmatpush1.bf16.msra.mxu0 %v416
      %436 = vmatprep.subr.bf16.mxu0 0
      %437 = vmatpush1.bf16.msra.mxu0 %v417
      %438 = vmatprep.subr.bf16.mxu0 0
      %439 = vmatpush1.bf16.msra.mxu0 %v418
      %440 = vmatprep.subr.bf16.mxu0 0
      %441 = vmatpush1.bf16.msra.mxu0 %v419
      %442 = vmatprep.subr.bf16.mxu0 0
      %443 = vmatpush1.bf16.msra.mxu0 %v420
      %444 = vmatprep.subr.bf16.mxu0 0
      %445 = vmatpush1.bf16.msra.mxu0 %v421
      %446 = vmatprep.subr.bf16.mxu0 0
      %447 = vmatpush1.bf16.msra.mxu0 0
      %448 = vmatprep.subr.bf16.mxu0 0
      %449 = vmatpush1.bf16.msra.mxu0 0
      %450 = vmatprep.subr.bf16.mxu0 0
      %451 = vmatpush1.bf16.msra.mxu0 0
      %452 = vmatprep.subr.bf16.mxu0 0
      %453 = vmatpush1.bf16.msra.mxu0 0
      %454 = vmatprep.subr.bf16.mxu0 0
      %455 = vmatpush1.bf16.msra.mxu0 0
      %456 = vmatprep.subr.bf16.mxu0 0
      %457 = vmatpush1.bf16.msra.mxu0 0
      %458 = vmatprep.subr.bf16.mxu0 0
      %459 = vmatpush1.bf16.msra.mxu0 0
      %460 = vmatprep.subr.bf16.mxu0 0
      %461 = vmatpush1.bf16.msra.mxu0 0
      %462 = vmatprep.mubr.bf16.mxu0 0
      %463 = vmatmul.mubr.bf16.gmra.mrb[0].mxu0 %v357
      %v464 = vpop.f32.mrb[0].mxu0
      %v465 = vadd.f32 %v380, %v464
      %v466 = vpop.f32.mrb[0].mxu0
      %v467 = vpop.f32.mrb[0].mxu0
      %v468 = vadd.f32 %v380, %v467
      %v469 = vpop.f32.mrb[0].mxu0
      %470 = vmatprep.mubr.bf16.mxu0 0
      %471 = vmatmul.mubr.bf16.gmra.mrb[0].mxu0 %v358
      %v472 = vpop.f32.mrb[0].mxu0
      %v473 = vadd.f32 %v380, %v472
      %v474 = vpop.f32.mrb[0].mxu0
      %v475 = vpop.f32.mrb[0].mxu0
      %v476 = vadd.f32 %v380, %v475
      %v477 = vpop.f32.mrb[0].mxu0
      %478 = vdwg.mxu0
      %479 = vst [vmem:[#allocation3] sm:$0xff] %v465
      %480 = vst [vmem:[#allocation3 + $0x8] sm:$0xff] %v468
      %481 = vst [vmem:[#allocation3 + $0x10] sm:$0xff] %v473
      %482 = vst [vmem:[#allocation3 + $0x18] sm:$0xff] %v476
    $region45: #{vgin_mol_head_encoder_forward.7} parent=1 // pred_fallthru
      _
    // Predicated region
    $region46: #{vgin_mol_head_encoder_forward.7} parent=1 // pred_check
      _
    $region47: #{vgin_mol_head_encoder_forward.7} parent=1 // pred_check_branch
      %484 = sbr.rel (0) target = $region49
    $region48: #{vgin_mol_head_encoder_forward.7} parent=1 // pred_region
      %s486 = ssub.s32 512, 512
      %487 = vsyncadd [#allocation4], %s486
      %s488 = sshll.u32 [#allocation3], 4
      %s489 = int_to_ptr.vmem [resolvable:$true] %s488
      %494 = dma.vmem_to_hbm [thread:$0]  %s489, 512, %s9, [#allocation4], 128, 128, 8
    $region49: #{vgin_mol_head_encoder_forward.7} parent=1 // pred_fallthru
      _
    // Predicated region
    $region50: #{vgin_mol_head_encoder_forward.7} parent=1 // pred_check
      _
    $region51: #{vgin_mol_head_encoder_forward.7} parent=1 // pred_check_branch
      %496 = sbr.rel (0) target = $region53
    $region52: #{vgin_mol_head_encoder_forward.7} parent=1 // pred_region
      %497 = dma.done [#allocation4], 512
    $region53: #{vgin_mol_head_encoder_forward.7} parent=1 // pred_fallthru
      _
    %498 = vsyncpa [#allocation4], 1

</llo_original>
